<compile_context>
chip_gen: v7x
topology: tpu7x:2x2x1
jax: 0.10.0
libtpu: 0.0.40
codegen_flags: <defaults>
</compile_context>

<pallas_src>
import math
import functools

import jax
import jax.numpy as jnp
from jax import lax
from jax.experimental import pallas as pl
from jax.experimental.pallas import tpu as pltpu


def attention_kernel(x_ref, wq_ref, wk_ref, wv_ref, wo_ref,
                     bq_ref, bk_ref, bv_ref, bo_ref,
                     o_ref, k_scr, v_scr, pv_scr,
                     *, n_heads, d_head, q_tile, fast):
    qi = pl.program_id(1)
    H, Dh = n_heads, d_head
    cdt = jnp.bfloat16 if fast else jnp.float32   # MXU input dtype

    x = x_ref[0].astype(cdt)                                              # (tq, D)

    # Head-fused, lane-dense projections for this query tile.
    # (1/sqrt(Dh) is already folded into wq/bq on the host.)
    q = (jnp.dot(x, wq_ref[...], preferred_element_type=jnp.float32)
         + bq_ref[...]).astype(cdt)                                       # (tq, H*Dh)
    k = jnp.dot(x, wk_ref[...], preferred_element_type=jnp.float32) + bk_ref[...]
    v = jnp.dot(x, wv_ref[...], preferred_element_type=jnp.float32) + bv_ref[...]

    # Causal mask helper: key_pos > query_pos  <=>  (col - row) > (qi - kv)*tq.
    row = lax.broadcasted_iota(jnp.int32, (q_tile, q_tile), 0)
    col = lax.broadcasted_iota(jnp.int32, (q_tile, q_tile), 1)
    diff = col - row
    neg = jnp.float32(-100000.0)

    for h in range(H):
        sl = slice(h * Dh, (h + 1) * Dh)

        # Append this tile's K/V for head h into the per-batch cache
        # (K stored transposed so the score matmul needs no RHS transpose).
        k_scr[h, qi] = jnp.transpose(k[:, sl].astype(k_scr.dtype))        # (Dh, tq)
        v_scr[h, qi] = v[:, sl].astype(v_scr.dtype)                       # (tq, Dh)

        q_h = q[:, sl]                                                    # (tq, Dh)

        # Online softmax over the causal prefix of KV tiles (0 .. qi).
        def kv_step(kv, carry):
            m, l, acc = carry
            k_blk = k_scr[h, kv].astype(cdt)                              # (Dh, tq)
            v_blk = v_scr[h, kv].astype(cdt)                              # (tq, Dh)
            s = jnp.dot(q_h, k_blk, preferred_element_type=jnp.float32)   # (tq, tq)
            # Mask is a no-op for kv < qi (diff never exceeds (qi-kv)*tq there),
            # and implements the module's masked_fill(-1e5) on the diagonal tile.
            s = jnp.where(diff > (qi - kv) * q_tile, neg, s)
            m_new = jnp.maximum(m, jnp.max(s, axis=-1, keepdims=True))
            alpha = jnp.exp(m - m_new)
            p = jnp.exp(s - m_new)
            l_new = alpha * l + jnp.sum(p, axis=-1, keepdims=True)
            acc_new = alpha * acc + jnp.dot(p.astype(cdt), v_blk,
                                            preferred_element_type=jnp.float32)
            return m_new, l_new, acc_new

        m0 = jnp.full((q_tile, 1), -jnp.inf, dtype=jnp.float32)
        l0 = jnp.zeros((q_tile, 1), dtype=jnp.float32)
        a0 = jnp.zeros((q_tile, Dh), dtype=jnp.float32)
        _, l_f, acc_f = lax.fori_loop(0, qi + 1, kv_step, (m0, l0, a0))

        # Deferred normalization: (tq,1) reciprocal broadcast over (tq,Dh).
        if fast:
            inv = pl.reciprocal(l_f, approx=True)
        else:
            inv = 1.0 / l_f
        pv_scr[:, sl] = (acc_f * inv).astype(pv_scr.dtype)

    # Single wide output projection over the head-concatenated slab.
    out = (jnp.dot(pv_scr[...], wo_ref[...], preferred_element_type=jnp.float32)
           + bo_ref[...])                                                 # (tq, D)
    o_ref[...] = out[None].astype(o_ref.dtype)


def attention_forward(x, W_Q, W_K, W_V, W_O, b_Q, b_K, b_V, b_O,
                      *, fast=False, q_tile=None):
    """x: (batch, posn, d_model) float32. Returns (batch, posn, d_model)."""
    B, S, D = x.shape
    H, _, Dh = W_Q.shape
    HD = H * Dh
    scale = 1.0 / math.sqrt(float(Dh))

    # Host-side layout plumbing: head-fused, lane-dense weights; scale folded
    # into the Q projection; bf16 weights in the fast path (halves VMEM/DMA).
    wdt = jnp.bfloat16 if fast else jnp.float32
    W_Qf = (jnp.transpose(W_Q, (1, 0, 2)).reshape(D, HD) * scale).astype(wdt)
    W_Kf = jnp.transpose(W_K, (1, 0, 2)).reshape(D, HD).astype(wdt)
    W_Vf = jnp.transpose(W_V, (1, 0, 2)).reshape(D, HD).astype(wdt)
    W_Of = W_O.reshape(HD, D).astype(wdt)
    b_Qf = (b_Q.reshape(1, HD) * scale).astype(jnp.float32)   # biases stay f32
    b_Kf = b_K.reshape(1, HD).astype(jnp.float32)
    b_Vf = b_V.reshape(1, HD).astype(jnp.float32)
    b_O2 = b_O.reshape(1, D).astype(jnp.float32)

    # Physical VMEM capacity (chip-aware limits / tiling).
    try:
        vmem_cap = int(pltpu.get_tpu_info().vmem_capacity_bytes)
    except Exception:  # pragma: no cover - conservative fallback
        vmem_cap = 64 * 1024 * 1024
    small_vmem = vmem_cap <= 72 * 1024 * 1024

    # Query/KV tile size: full S for small sequences, else a 128-aligned tile
    # (>=256 to keep MXU output tiles saturated; 256 on 64-MiB parts at S>=2048).
    if q_tile is None:
        q_tile = S
        candidates = (256, 128) if (small_vmem and S >= 2048) else (512, 256, 128)
        for cand in candidates:
            if S > cand and S % cand == 0:
                q_tile = cand
                break
    assert S % q_tile == 0, "sequence length must be divisible by q_tile"
    n_q = S // q_tile

    cache_dt = jnp.bfloat16 if fast else jnp.float32
    wbytes = 2 if fast else 4
    cbytes = 2 if fast else 4

    # VMEM budget estimate (generous) -> always set a chip-aware limit
    # (v5e default scoped limit is only ~16 MiB; never exceed 85% of physical).
    est_vmem = (2 * 2 * q_tile * D * 4                 # x in + out blocks, double-buffered
                + 2 * 4 * D * HD * wbytes              # resident fused weights (2x buffers)
                + 2 * H * S * Dh * cbytes              # K + V caches
                + q_tile * HD * 4                      # pv slab
                + 6 * q_tile * q_tile * 4              # per-tile score/softmax temporaries
                + 4 * q_tile * Dh * 4)                 # online-softmax accumulators
    vmem_limit = int(min(max(est_vmem * 1.25, 32 * 1024 * 1024),
                         0.85 * vmem_cap))

    kernel = functools.partial(attention_kernel, n_heads=H, d_head=Dh,
                               q_tile=q_tile, fast=fast)

    grid_spec = pltpu.PrefetchScalarGridSpec(
        num_scalar_prefetch=0,
        grid=(B, n_q),
        in_specs=[
            pl.BlockSpec((1, q_tile, D), lambda b, qi: (b, qi, 0)),  # x (query tile)
            pl.BlockSpec((D, HD),        lambda b, qi: (0, 0)),      # W_Qf (resident)
            pl.BlockSpec((D, HD),        lambda b, qi: (0, 0)),      # W_Kf (resident)
            pl.BlockSpec((D, HD),        lambda b, qi: (0, 0)),      # W_Vf (resident)
            pl.BlockSpec((HD, D),        lambda b, qi: (0, 0)),      # W_Of (resident)
            pl.BlockSpec((1, HD),        lambda b, qi: (0, 0)),      # b_Qf
            pl.BlockSpec((1, HD),        lambda b, qi: (0, 0)),      # b_Kf
            pl.BlockSpec((1, HD),        lambda b, qi: (0, 0)),      # b_Vf
            pl.BlockSpec((1, D),         lambda b, qi: (0, 0)),      # b_O
        ],
        out_specs=pl.BlockSpec((1, q_tile, D), lambda b, qi: (b, qi, 0)),
        scratch_shapes=[
            pltpu.VMEM((H, n_q, Dh, q_tile), cache_dt),   # K cache (transposed, head-major)
            pltpu.VMEM((H, n_q, q_tile, Dh), cache_dt),   # V cache (head-major)
            pltpu.VMEM((q_tile, HD), cache_dt),           # per-tile pv slab
        ],
    )

    return pl.pallas_call(
        kernel,
        out_shape=jax.ShapeDtypeStruct((B, S, D), x.dtype),
        grid_spec=grid_spec,
        compiler_params=pltpu.CompilerParams(
            dimension_semantics=("parallel", "arbitrary"),
            vmem_limit_bytes=vmem_limit),
    )(x, W_Qf, W_Kf, W_Vf, W_Of, b_Qf, b_Kf, b_Vf, b_O2)


def attention_reference(x, W_Q, W_K, W_V, W_O, b_Q, b_K, b_V, b_O):
    """Pure-JAX reference mirroring the PyTorch forward exactly."""
    q = jnp.einsum('nmh,bpm->bpnh', W_Q, x) + b_Q
    k = jnp.einsum('nmh,bpm->bpnh', W_K, x) + b_K
    v = jnp.einsum('nmh,bpm->bpnh', W_V, x) + b_V
    d_head = W_Q.shape[-1]
    scores = jnp.einsum('bqnh,bknh->bnqk', q, k) / jnp.sqrt(jnp.float32(d_head))
    S = scores.shape[-1]
    mask = jnp.triu(jnp.ones((S, S), dtype=bool), k=1)
    scores = jnp.where(mask, jnp.float32(-100000.0), scores)
    probs = jax.nn.softmax(scores, axis=-1)
    wv = jnp.einsum('bnqk,bknh->bqnh', probs, v)
    out = jnp.einsum('nhm,bqnh->bqnm', W_O, wv)
    return out.sum(axis=2) + b_O


if __name__ == "__main__":
    # Small config consistent with the module: d_model=32, n_heads=4, d_head=8
    B, S, D, H, Dh = 2, 8, 32, 4, 8
    init_range = 0.02

    key = jax.random.PRNGKey(0)
    kx, kq, kk, kv, ko = jax.random.split(key, 5)

    x = jax.random.normal(kx, (B, S, D), dtype=jnp.float32)
    W_Q = init_range * jax.random.normal(kq, (H, D, Dh), dtype=jnp.float32)
    W_K = init_range * jax.random.normal(kk, (H, D, Dh), dtype=jnp.float32)
    W_V = init_range * jax.random.normal(kv, (H, D, Dh), dtype=jnp.float32)
    W_O = init_range * jax.random.normal(ko, (H, Dh, D), dtype=jnp.float32)
    b_Q = jnp.zeros((H, Dh), dtype=jnp.float32)
    b_K = jnp.zeros((H, Dh), dtype=jnp.float32)
    b_V = jnp.zeros((H, Dh), dtype=jnp.float32)
    b_O = jnp.zeros((D,), dtype=jnp.float32)

    ref = attention_reference(x, W_Q, W_K, W_V, W_O, b_Q, b_K, b_V, b_O)

    # f32 path: strict check against the reference.
    out = attention_forward(x, W_Q, W_K, W_V, W_O, b_Q, b_K, b_V, b_O, fast=False)
    out = jax.block_until_ready(out)
    assert out.shape == (B, S, D)
    assert jnp.allclose(out, ref, atol=1e-5, rtol=1e-5), "f32 path mismatch vs reference"

    # bf16 fast path: looser tolerance (bf16 MXU inputs + approx reciprocal).
    out_fast = attention_forward(x, W_Q, W_K, W_V, W_O, b_Q, b_K, b_V, b_O, fast=True)
    out_fast = jax.block_until_ready(out_fast)
    assert jnp.allclose(out_fast, ref, atol=1e-2, rtol=1e-2), "bf16 path mismatch vs reference"

    print("KERNEL_OK")
</pallas_src>

<mosaic_0001>
module attributes {stable_mosaic.version = 11 : i64} {
  func.func @attention_kernel(%arg0: i32, %arg1: i32, %arg2: memref<1x8x32xf32, #tpu.memory_space<vmem>>, %arg3: memref<32x32xf32, #tpu.memory_space<vmem>>, %arg4: memref<32x32xf32, #tpu.memory_space<vmem>>, %arg5: memref<32x32xf32, #tpu.memory_space<vmem>>, %arg6: memref<32x32xf32, #tpu.memory_space<vmem>>, %arg7: memref<1x32xf32, #tpu.memory_space<vmem>>, %arg8: memref<1x32xf32, #tpu.memory_space<vmem>>, %arg9: memref<1x32xf32, #tpu.memory_space<vmem>>, %arg10: memref<1x32xf32, #tpu.memory_space<vmem>>, %arg11: memref<1x8x32xf32, #tpu.memory_space<vmem>>, %arg12: memref<4x1x8x8xf32, #tpu.memory_space<vmem>>, %arg13: memref<4x1x8x8xf32, #tpu.memory_space<vmem>>, %arg14: memref<8x32xf32, #tpu.memory_space<vmem>>) attributes {dimension_semantics = [#tpu.dimension_semantics<parallel>, #tpu.dimension_semantics<arbitrary>], iteration_bounds = array<i64: 2, 1>, scalar_prefetch = 0 : i64, scratch_operands = 3 : i64, tpu.core_type = #tpu.core_type<tc>, window_params = [{transform_indices = @transform_0, window_bounds = array<i64: 1, 8, 32>}, {pipeline_mode = #tpu.pipeline_mode<synchronous>, transform_indices = @transform_1, window_bounds = array<i64: 32, 32>}, {pipeline_mode = #tpu.pipeline_mode<synchronous>, transform_indices = @transform_2, window_bounds = array<i64: 32, 32>}, {pipeline_mode = #tpu.pipeline_mode<synchronous>, transform_indices = @transform_3, window_bounds = array<i64: 32, 32>}, {pipeline_mode = #tpu.pipeline_mode<synchronous>, transform_indices = @transform_4, window_bounds = array<i64: 32, 32>}, {pipeline_mode = #tpu.pipeline_mode<synchronous>, transform_indices = @transform_5, window_bounds = array<i64: 1, 32>}, {pipeline_mode = #tpu.pipeline_mode<synchronous>, transform_indices = @transform_6, window_bounds = array<i64: 1, 32>}, {pipeline_mode = #tpu.pipeline_mode<synchronous>, transform_indices = @transform_7, window_bounds = array<i64: 1, 32>}, {pipeline_mode = #tpu.pipeline_mode<synchronous>, transform_indices = @transform_8, window_bounds = array<i64: 1, 32>}, {transform_indices = @transform_9, window_bounds = array<i64: 1, 8, 32>}]} {
    %c0 = arith.constant 0 : index
    %c0_0 = arith.constant 0 : index
    %c0_1 = arith.constant 0 : index
    %0 = vector.load %arg2[%c0, %c0_0, %c0_1] : memref<1x8x32xf32, #tpu.memory_space<vmem>>, vector<1x8x32xf32>
    %1 = vector.shape_cast %0 : vector<1x8x32xf32> to vector<8x32xf32>
    %c0_2 = arith.constant 0 : index
    %c0_3 = arith.constant 0 : index
    %2 = vector.load %arg3[%c0_2, %c0_3] : memref<32x32xf32, #tpu.memory_space<vmem>>, vector<32x32xf32>
    %cst = arith.constant dense<0.000000e+00> : vector<8x32xf32>
    %3 = tpu.matmul %1, %2, %cst {dimension_numbers = #tpu.dot_dimension_numbers<[1], [0], [0], [1], [0, 0, 1, 1], [], []>} : vector<8x32xf32>, vector<32x32xf32>, vector<8x32xf32> -> vector<8x32xf32>
    %c0_4 = arith.constant 0 : index
    %c0_5 = arith.constant 0 : index
    %4 = vector.load %arg7[%c0_4, %c0_5] : memref<1x32xf32, #tpu.memory_space<vmem>>, vector<1x32xf32>
    %5 = vector.broadcast %4 : vector<1x32xf32> to vector<8x32xf32>
    %6 = arith.addf %3, %5 : vector<8x32xf32>
    %c0_6 = arith.constant 0 : index
    %c0_7 = arith.constant 0 : index
    %7 = vector.load %arg4[%c0_6, %c0_7] : memref<32x32xf32, #tpu.memory_space<vmem>>, vector<32x32xf32>
    %cst_8 = arith.constant dense<0.000000e+00> : vector<8x32xf32>
    %8 = tpu.matmul %1, %7, %cst_8 {dimension_numbers = #tpu.dot_dimension_numbers<[1], [0], [0], [1], [0, 0, 1, 1], [], []>} : vector<8x32xf32>, vector<32x32xf32>, vector<8x32xf32> -> vector<8x32xf32>
    %c0_9 = arith.constant 0 : index
    %c0_10 = arith.constant 0 : index
    %9 = vector.load %arg8[%c0_9, %c0_10] : memref<1x32xf32, #tpu.memory_space<vmem>>, vector<1x32xf32>
    %10 = vector.broadcast %9 : vector<1x32xf32> to vector<8x32xf32>
    %11 = arith.addf %8, %10 : vector<8x32xf32>
    %c0_11 = arith.constant 0 : index
    %c0_12 = arith.constant 0 : index
    %12 = vector.load %arg5[%c0_11, %c0_12] : memref<32x32xf32, #tpu.memory_space<vmem>>, vector<32x32xf32>
    %cst_13 = arith.constant dense<0.000000e+00> : vector<8x32xf32>
    %13 = tpu.matmul %1, %12, %cst_13 {dimension_numbers = #tpu.dot_dimension_numbers<[1], [0], [0], [1], [0, 0, 1, 1], [], []>} : vector<8x32xf32>, vector<32x32xf32>, vector<8x32xf32> -> vector<8x32xf32>
    %c0_14 = arith.constant 0 : index
    %c0_15 = arith.constant 0 : index
    %14 = vector.load %arg9[%c0_14, %c0_15] : memref<1x32xf32, #tpu.memory_space<vmem>>, vector<1x32xf32>
    %15 = vector.broadcast %14 : vector<1x32xf32> to vector<8x32xf32>
    %16 = arith.addf %13, %15 : vector<8x32xf32>
    %17 = tpu.iota {dimensions = array<i32: 0>} : vector<8x8xi32>
    %18 = tpu.iota {dimensions = array<i32: 1>} : vector<8x8xi32>
    %19 = arith.subi %18, %17 : vector<8x8xi32>
    %20 = vector.extract_strided_slice %11 {offsets = [0, 0], sizes = [8, 8], strides = [1, 1]} : vector<8x32xf32> to vector<8x8xf32>
    %21 = tpu.transpose %20, [1, 0] : vector<8x8xf32> -> vector<8x8xf32>
    %c0_16 = arith.constant 0 : index
    %22 = arith.index_cast %arg1 : i32 to index
    %c0_17 = arith.constant 0 : index
    %c0_18 = arith.constant 0 : index
    %23 = vector.load %arg12[%c0_16, %22, %c0_17, %c0_18] : memref<4x1x8x8xf32, #tpu.memory_space<vmem>>, vector<1x1x8x8xf32>
    %24 = vector.shape_cast %23 : vector<1x1x8x8xf32> to vector<8x8xf32>
    %25 = vector.shape_cast %21 : vector<8x8xf32> to vector<1x1x8x8xf32>
    tpu.vector_store %arg12[%c0_16, %22, %c0_17, %c0_18], %25 {strides = array<i32>} : memref<4x1x8x8xf32, #tpu.memory_space<vmem>>, vector<1x1x8x8xf32>,
    %26 = vector.extract_strided_slice %16 {offsets = [0, 0], sizes = [8, 8], strides = [1, 1]} : vector<8x32xf32> to vector<8x8xf32>
    %c0_19 = arith.constant 0 : index
    %27 = arith.index_cast %arg1 : i32 to index
    %c0_20 = arith.constant 0 : index
    %c0_21 = arith.constant 0 : index
    %28 = vector.load %arg13[%c0_19, %27, %c0_20, %c0_21] : memref<4x1x8x8xf32, #tpu.memory_space<vmem>>, vector<1x1x8x8xf32>
    %29 = vector.shape_cast %28 : vector<1x1x8x8xf32> to vector<8x8xf32>
    %30 = vector.shape_cast %26 : vector<8x8xf32> to vector<1x1x8x8xf32>
    tpu.vector_store %arg13[%c0_19, %27, %c0_20, %c0_21], %30 {strides = array<i32>} : memref<4x1x8x8xf32, #tpu.memory_space<vmem>>, vector<1x1x8x8xf32>,
    %31 = vector.extract_strided_slice %6 {offsets = [0, 0], sizes = [8, 8], strides = [1, 1]} : vector<8x32xf32> to vector<8x8xf32>
    %cst_22 = arith.constant 0xFF800000 : f32
    %32 = vector.broadcast %cst_22 : f32 to vector<8x1xf32>
    %cst_23 = arith.constant 0.000000e+00 : f32
    %33 = vector.broadcast %cst_23 : f32 to vector<8x1xf32>
    %cst_24 = arith.constant 0.000000e+00 : f32
    %34 = vector.broadcast %cst_24 : f32 to vector<8x8xf32>
    %c1_i32 = arith.constant 1 : i32
    %35 = arith.addi %arg1, %c1_i32 : i32
    %cst_25 = arith.constant -1.000000e+05 : f32
    %c0_i32 = arith.constant 0 : i32
    %36 = arith.subi %35, %c0_i32 : i32
    %37 = arith.addi %c0_i32, %36 : i32
    %c1_i32_26 = arith.constant 1 : i32
    %38:3 = scf.for %arg15 = %c0_i32 to %37 step %c1_i32_26 iter_args(%arg16 = %32, %arg17 = %33, %arg18 = %34) -> (vector<8x1xf32>, vector<8x1xf32>, vector<8x8xf32>)  : i32 {
      %c0_82 = arith.constant 0 : index
      %124 = arith.index_cast %arg15 : i32 to index
      %c0_83 = arith.constant 0 : index
      %c0_84 = arith.constant 0 : index
      %125 = vector.load %arg12[%c0_82, %124, %c0_83, %c0_84] : memref<4x1x8x8xf32, #tpu.memory_space<vmem>>, vector<1x1x8x8xf32>
      %126 = vector.shape_cast %125 : vector<1x1x8x8xf32> to vector<8x8xf32>
      %c0_85 = arith.constant 0 : index
      %127 = arith.index_cast %arg15 : i32 to index
      %c0_86 = arith.constant 0 : index
      %c0_87 = arith.constant 0 : index
      %128 = vector.load %arg13[%c0_85, %127, %c0_86, %c0_87] : memref<4x1x8x8xf32, #tpu.memory_space<vmem>>, vector<1x1x8x8xf32>
      %129 = vector.shape_cast %128 : vector<1x1x8x8xf32> to vector<8x8xf32>
      %cst_88 = arith.constant dense<0.000000e+00> : vector<8x8xf32>
      %130 = tpu.matmul %31, %126, %cst_88 {dimension_numbers = #tpu.dot_dimension_numbers<[1], [0], [0], [1], [0, 0, 1, 1], [], []>} : vector<8x8xf32>, vector<8x8xf32>, vector<8x8xf32> -> vector<8x8xf32>
      %131 = arith.subi %arg1, %arg15 : i32
      %c8_i32 = arith.constant 8 : i32
      %132 = arith.muli %131, %c8_i32 : i32
      %133 = vector.broadcast %132 : i32 to vector<8x8xi32>
      %134 = arith.cmpi sgt, %19, %133 : vector<8x8xi32>
      %135 = vector.broadcast %cst_25 : f32 to vector<8x8xf32>
      %136 = arith.select %134, %135, %130 : vector<8x8xi1>, vector<8x8xf32>
      %cst_89 = arith.constant dense<0xFF800000> : vector<8xf32>
      %137 = vector.multi_reduction <maximumf>, %136, %cst_89 [1] : vector<8x8xf32> to vector<8xf32>
      %138 = vector.shape_cast %137 : vector<8xf32> to vector<8x1xf32>
      %139 = arith.maximumf %arg16, %138 : vector<8x1xf32>
      %140 = arith.subf %arg16, %139 : vector<8x1xf32>
      %141 = math.exp %140 : vector<8x1xf32>
      %142 = vector.broadcast %139 : vector<8x1xf32> to vector<8x8xf32>
      %143 = arith.subf %136, %142 : vector<8x8xf32>
      %144 = math.exp %143 : vector<8x8xf32>
      %145 = arith.mulf %141, %arg17 : vector<8x1xf32>
      %cst_90 = arith.constant dense<0.000000e+00> : vector<8xf32>
      %146 = vector.multi_reduction <add>, %144, %cst_90 [1] : vector<8x8xf32> to vector<8xf32>
      %147 = vector.shape_cast %146 : vector<8xf32> to vector<8x1xf32>
      %148 = arith.addf %145, %147 : vector<8x1xf32>
      %149 = vector.broadcast %141 : vector<8x1xf32> to vector<8x8xf32>
      %150 = arith.mulf %149, %arg18 : vector<8x8xf32>
      %cst_91 = arith.constant dense<0.000000e+00> : vector<8x8xf32>
      %151 = tpu.matmul %144, %129, %cst_91 {dimension_numbers = #tpu.dot_dimension_numbers<[1], [0], [0], [1], [0, 0, 1, 1], [], []>} : vector<8x8xf32>, vector<8x8xf32>, vector<8x8xf32> -> vector<8x8xf32>
      %152 = arith.addf %150, %151 : vector<8x8xf32>
      scf.yield %139, %148, %152 : vector<8x1xf32>, vector<8x1xf32>, vector<8x8xf32>
    }
    %cst_27 = arith.constant 1.000000e+00 : f32
    %39 = vector.broadcast %cst_27 : f32 to vector<8x1xf32>
    %40 = arith.divf %39, %38#1 : vector<8x1xf32>
    %41 = vector.broadcast %40 : vector<8x1xf32> to vector<8x8xf32>
    %42 = arith.mulf %38#2, %41 : vector<8x8xf32>
    %c0_28 = arith.constant 0 : index
    %c0_29 = arith.constant 0 : index
    %43 = vector.load %arg14[%c0_28, %c0_29] : memref<8x32xf32, #tpu.memory_space<vmem>>, vector<8x8xf32>
    tpu.vector_store %arg14[%c0_28, %c0_29], %42 {strides = array<i32>} : memref<8x32xf32, #tpu.memory_space<vmem>>, vector<8x8xf32>,
    %44 = vector.extract_strided_slice %11 {offsets = [0, 8], sizes = [8, 8], strides = [1, 1]} : vector<8x32xf32> to vector<8x8xf32>
    %45 = tpu.transpose %44, [1, 0] : vector<8x8xf32> -> vector<8x8xf32>
    %c1 = arith.constant 1 : index
    %46 = arith.index_cast %arg1 : i32 to index
    %c0_30 = arith.constant 0 : index
    %c0_31 = arith.constant 0 : index
    %47 = vector.load %arg12[%c1, %46, %c0_30, %c0_31] : memref<4x1x8x8xf32, #tpu.memory_space<vmem>>, vector<1x1x8x8xf32>
    %48 = vector.shape_cast %47 : vector<1x1x8x8xf32> to vector<8x8xf32>
    %49 = vector.shape_cast %45 : vector<8x8xf32> to vector<1x1x8x8xf32>
    tpu.vector_store %arg12[%c1, %46, %c0_30, %c0_31], %49 {strides = array<i32>} : memref<4x1x8x8xf32, #tpu.memory_space<vmem>>, vector<1x1x8x8xf32>,
    %50 = vector.extract_strided_slice %16 {offsets = [0, 8], sizes = [8, 8], strides = [1, 1]} : vector<8x32xf32> to vector<8x8xf32>
    %c1_32 = arith.constant 1 : index
    %51 = arith.index_cast %arg1 : i32 to index
    %c0_33 = arith.constant 0 : index
    %c0_34 = arith.constant 0 : index
    %52 = vector.load %arg13[%c1_32, %51, %c0_33, %c0_34] : memref<4x1x8x8xf32, #tpu.memory_space<vmem>>, vector<1x1x8x8xf32>
    %53 = vector.shape_cast %52 : vector<1x1x8x8xf32> to vector<8x8xf32>
    %54 = vector.shape_cast %50 : vector<8x8xf32> to vector<1x1x8x8xf32>
    tpu.vector_store %arg13[%c1_32, %51, %c0_33, %c0_34], %54 {strides = array<i32>} : memref<4x1x8x8xf32, #tpu.memory_space<vmem>>, vector<1x1x8x8xf32>,
    %55 = vector.extract_strided_slice %6 {offsets = [0, 8], sizes = [8, 8], strides = [1, 1]} : vector<8x32xf32> to vector<8x8xf32>
    %cst_35 = arith.constant 0xFF800000 : f32
    %56 = vector.broadcast %cst_35 : f32 to vector<8x1xf32>
    %cst_36 = arith.constant 0.000000e+00 : f32
    %57 = vector.broadcast %cst_36 : f32 to vector<8x1xf32>
    %cst_37 = arith.constant 0.000000e+00 : f32
    %58 = vector.broadcast %cst_37 : f32 to vector<8x8xf32>
    %c1_i32_38 = arith.constant 1 : i32
    %59 = arith.addi %arg1, %c1_i32_38 : i32
    %cst_39 = arith.constant -1.000000e+05 : f32
    %c0_i32_40 = arith.constant 0 : i32
    %60 = arith.subi %59, %c0_i32_40 : i32
    %61 = arith.addi %c0_i32_40, %60 : i32
    %c1_i32_41 = arith.constant 1 : i32
    %62:3 = scf.for %arg15 = %c0_i32_40 to %61 step %c1_i32_41 iter_args(%arg16 = %56, %arg17 = %57, %arg18 = %58) -> (vector<8x1xf32>, vector<8x1xf32>, vector<8x8xf32>)  : i32 {
      %c1_82 = arith.constant 1 : index
      %124 = arith.index_cast %arg15 : i32 to index
      %c0_83 = arith.constant 0 : index
      %c0_84 = arith.constant 0 : index
      %125 = vector.load %arg12[%c1_82, %124, %c0_83, %c0_84] : memref<4x1x8x8xf32, #tpu.memory_space<vmem>>, vector<1x1x8x8xf32>
      %126 = vector.shape_cast %125 : vector<1x1x8x8xf32> to vector<8x8xf32>
      %c1_85 = arith.constant 1 : index
      %127 = arith.index_cast %arg15 : i32 to index
      %c0_86 = arith.constant 0 : index
      %c0_87 = arith.constant 0 : index
      %128 = vector.load %arg13[%c1_85, %127, %c0_86, %c0_87] : memref<4x1x8x8xf32, #tpu.memory_space<vmem>>, vector<1x1x8x8xf32>
      %129 = vector.shape_cast %128 : vector<1x1x8x8xf32> to vector<8x8xf32>
      %cst_88 = arith.constant dense<0.000000e+00> : vector<8x8xf32>
      %130 = tpu.matmul %55, %126, %cst_88 {dimension_numbers = #tpu.dot_dimension_numbers<[1], [0], [0], [1], [0, 0, 1, 1], [], []>} : vector<8x8xf32>, vector<8x8xf32>, vector<8x8xf32> -> vector<8x8xf32>
      %131 = arith.subi %arg1, %arg15 : i32
      %c8_i32 = arith.constant 8 : i32
      %132 = arith.muli %131, %c8_i32 : i32
      %133 = vector.broadcast %132 : i32 to vector<8x8xi32>
      %134 = arith.cmpi sgt, %19, %133 : vector<8x8xi32>
      %135 = vector.broadcast %cst_39 : f32 to vector<8x8xf32>
      %136 = arith.select %134, %135, %130 : vector<8x8xi1>, vector<8x8xf32>
      %cst_89 = arith.constant dense<0xFF800000> : vector<8xf32>
      %137 = vector.multi_reduction <maximumf>, %136, %cst_89 [1] : vector<8x8xf32> to vector<8xf32>
      %138 = vector.shape_cast %137 : vector<8xf32> to vector<8x1xf32>
      %139 = arith.maximumf %arg16, %138 : vector<8x1xf32>
      %140 = arith.subf %arg16, %139 : vector<8x1xf32>
      %141 = math.exp %140 : vector<8x1xf32>
      %142 = vector.broadcast %139 : vector<8x1xf32> to vector<8x8xf32>
      %143 = arith.subf %136, %142 : vector<8x8xf32>
      %144 = math.exp %143 : vector<8x8xf32>
      %145 = arith.mulf %141, %arg17 : vector<8x1xf32>
      %cst_90 = arith.constant dense<0.000000e+00> : vector<8xf32>
      %146 = vector.multi_reduction <add>, %144, %cst_90 [1] : vector<8x8xf32> to vector<8xf32>
      %147 = vector.shape_cast %146 : vector<8xf32> to vector<8x1xf32>
      %148 = arith.addf %145, %147 : vector<8x1xf32>
      %149 = vector.broadcast %141 : vector<8x1xf32> to vector<8x8xf32>
      %150 = arith.mulf %149, %arg18 : vector<8x8xf32>
      %cst_91 = arith.constant dense<0.000000e+00> : vector<8x8xf32>
      %151 = tpu.matmul %144, %129, %cst_91 {dimension_numbers = #tpu.dot_dimension_numbers<[1], [0], [0], [1], [0, 0, 1, 1], [], []>} : vector<8x8xf32>, vector<8x8xf32>, vector<8x8xf32> -> vector<8x8xf32>
      %152 = arith.addf %150, %151 : vector<8x8xf32>
      scf.yield %139, %148, %152 : vector<8x1xf32>, vector<8x1xf32>, vector<8x8xf32>
    }
    %cst_42 = arith.constant 1.000000e+00 : f32
    %63 = vector.broadcast %cst_42 : f32 to vector<8x1xf32>
    %64 = arith.divf %63, %62#1 : vector<8x1xf32>
    %65 = vector.broadcast %64 : vector<8x1xf32> to vector<8x8xf32>
    %66 = arith.mulf %62#2, %65 : vector<8x8xf32>
    %c0_43 = arith.constant 0 : index
    %c8 = arith.constant 8 : index
    %67 = vector.load %arg14[%c0_43, %c8] : memref<8x32xf32, #tpu.memory_space<vmem>>, vector<8x8xf32>
    tpu.vector_store %arg14[%c0_43, %c8], %66 {strides = array<i32>} : memref<8x32xf32, #tpu.memory_space<vmem>>, vector<8x8xf32>,
    %68 = vector.extract_strided_slice %11 {offsets = [0, 16], sizes = [8, 8], strides = [1, 1]} : vector<8x32xf32> to vector<8x8xf32>
    %69 = tpu.transpose %68, [1, 0] : vector<8x8xf32> -> vector<8x8xf32>
    %c2 = arith.constant 2 : index
    %70 = arith.index_cast %arg1 : i32 to index
    %c0_44 = arith.constant 0 : index
    %c0_45 = arith.constant 0 : index
    %71 = vector.load %arg12[%c2, %70, %c0_44, %c0_45] : memref<4x1x8x8xf32, #tpu.memory_space<vmem>>, vector<1x1x8x8xf32>
    %72 = vector.shape_cast %71 : vector<1x1x8x8xf32> to vector<8x8xf32>
    %73 = vector.shape_cast %69 : vector<8x8xf32> to vector<1x1x8x8xf32>
    tpu.vector_store %arg12[%c2, %70, %c0_44, %c0_45], %73 {strides = array<i32>} : memref<4x1x8x8xf32, #tpu.memory_space<vmem>>, vector<1x1x8x8xf32>,
    %74 = vector.extract_strided_slice %16 {offsets = [0, 16], sizes = [8, 8], strides = [1, 1]} : vector<8x32xf32> to vector<8x8xf32>
    %c2_46 = arith.constant 2 : index
    %75 = arith.index_cast %arg1 : i32 to index
    %c0_47 = arith.constant 0 : index
    %c0_48 = arith.constant 0 : index
    %76 = vector.load %arg13[%c2_46, %75, %c0_47, %c0_48] : memref<4x1x8x8xf32, #tpu.memory_space<vmem>>, vector<1x1x8x8xf32>
    %77 = vector.shape_cast %76 : vector<1x1x8x8xf32> to vector<8x8xf32>
    %78 = vector.shape_cast %74 : vector<8x8xf32> to vector<1x1x8x8xf32>
    tpu.vector_store %arg13[%c2_46, %75, %c0_47, %c0_48], %78 {strides = array<i32>} : memref<4x1x8x8xf32, #tpu.memory_space<vmem>>, vector<1x1x8x8xf32>,
    %79 = vector.extract_strided_slice %6 {offsets = [0, 16], sizes = [8, 8], strides = [1, 1]} : vector<8x32xf32> to vector<8x8xf32>
    %cst_49 = arith.constant 0xFF800000 : f32
    %80 = vector.broadcast %cst_49 : f32 to vector<8x1xf32>
    %cst_50 = arith.constant 0.000000e+00 : f32
    %81 = vector.broadcast %cst_50 : f32 to vector<8x1xf32>
    %cst_51 = arith.constant 0.000000e+00 : f32
    %82 = vector.broadcast %cst_51 : f32 to vector<8x8xf32>
    %c1_i32_52 = arith.constant 1 : i32
    %83 = arith.addi %arg1, %c1_i32_52 : i32
    %cst_53 = arith.constant -1.000000e+05 : f32
    %c0_i32_54 = arith.constant 0 : i32
    %84 = arith.subi %83, %c0_i32_54 : i32
    %85 = arith.addi %c0_i32_54, %84 : i32
    %c1_i32_55 = arith.constant 1 : i32
    %86:3 = scf.for %arg15 = %c0_i32_54 to %85 step %c1_i32_55 iter_args(%arg16 = %80, %arg17 = %81, %arg18 = %82) -> (vector<8x1xf32>, vector<8x1xf32>, vector<8x8xf32>)  : i32 {
      %c2_82 = arith.constant 2 : index
      %124 = arith.index_cast %arg15 : i32 to index
      %c0_83 = arith.constant 0 : index
      %c0_84 = arith.constant 0 : index
      %125 = vector.load %arg12[%c2_82, %124, %c0_83, %c0_84] : memref<4x1x8x8xf32, #tpu.memory_space<vmem>>, vector<1x1x8x8xf32>
      %126 = vector.shape_cast %125 : vector<1x1x8x8xf32> to vector<8x8xf32>
      %c2_85 = arith.constant 2 : index
      %127 = arith.index_cast %arg15 : i32 to index
      %c0_86 = arith.constant 0 : index
      %c0_87 = arith.constant 0 : index
      %128 = vector.load %arg13[%c2_85, %127, %c0_86, %c0_87] : memref<4x1x8x8xf32, #tpu.memory_space<vmem>>, vector<1x1x8x8xf32>
      %129 = vector.shape_cast %128 : vector<1x1x8x8xf32> to vector<8x8xf32>
      %cst_88 = arith.constant dense<0.000000e+00> : vector<8x8xf32>
      %130 = tpu.matmul %79, %126, %cst_88 {dimension_numbers = #tpu.dot_dimension_numbers<[1], [0], [0], [1], [0, 0, 1, 1], [], []>} : vector<8x8xf32>, vector<8x8xf32>, vector<8x8xf32> -> vector<8x8xf32>
      %131 = arith.subi %arg1, %arg15 : i32
      %c8_i32 = arith.constant 8 : i32
      %132 = arith.muli %131, %c8_i32 : i32
      %133 = vector.broadcast %132 : i32 to vector<8x8xi32>
      %134 = arith.cmpi sgt, %19, %133 : vector<8x8xi32>
      %135 = vector.broadcast %cst_53 : f32 to vector<8x8xf32>
      %136 = arith.select %134, %135, %130 : vector<8x8xi1>, vector<8x8xf32>
      %cst_89 = arith.constant dense<0xFF800000> : vector<8xf32>
      %137 = vector.multi_reduction <maximumf>, %136, %cst_89 [1] : vector<8x8xf32> to vector<8xf32>
      %138 = vector.shape_cast %137 : vector<8xf32> to vector<8x1xf32>
      %139 = arith.maximumf %arg16, %138 : vector<8x1xf32>
      %140 = arith.subf %arg16, %139 : vector<8x1xf32>
      %141 = math.exp %140 : vector<8x1xf32>
      %142 = vector.broadcast %139 : vector<8x1xf32> to vector<8x8xf32>
      %143 = arith.subf %136, %142 : vector<8x8xf32>
      %144 = math.exp %143 : vector<8x8xf32>
      %145 = arith.mulf %141, %arg17 : vector<8x1xf32>
      %cst_90 = arith.constant dense<0.000000e+00> : vector<8xf32>
      %146 = vector.multi_reduction <add>, %144, %cst_90 [1] : vector<8x8xf32> to vector<8xf32>
      %147 = vector.shape_cast %146 : vector<8xf32> to vector<8x1xf32>
      %148 = arith.addf %145, %147 : vector<8x1xf32>
      %149 = vector.broadcast %141 : vector<8x1xf32> to vector<8x8xf32>
      %150 = arith.mulf %149, %arg18 : vector<8x8xf32>
      %cst_91 = arith.constant dense<0.000000e+00> : vector<8x8xf32>
      %151 = tpu.matmul %144, %129, %cst_91 {dimension_numbers = #tpu.dot_dimension_numbers<[1], [0], [0], [1], [0, 0, 1, 1], [], []>} : vector<8x8xf32>, vector<8x8xf32>, vector<8x8xf32> -> vector<8x8xf32>
      %152 = arith.addf %150, %151 : vector<8x8xf32>
      scf.yield %139, %148, %152 : vector<8x1xf32>, vector<8x1xf32>, vector<8x8xf32>
    }
    %cst_56 = arith.constant 1.000000e+00 : f32
    %87 = vector.broadcast %cst_56 : f32 to vector<8x1xf32>
    %88 = arith.divf %87, %86#1 : vector<8x1xf32>
    %89 = vector.broadcast %88 : vector<8x1xf32> to vector<8x8xf32>
    %90 = arith.mulf %86#2, %89 : vector<8x8xf32>
    %c0_57 = arith.constant 0 : index
    %c16 = arith.constant 16 : index
    %91 = vector.load %arg14[%c0_57, %c16] : memref<8x32xf32, #tpu.memory_space<vmem>>, vector<8x8xf32>
    tpu.vector_store %arg14[%c0_57, %c16], %90 {strides = array<i32>} : memref<8x32xf32, #tpu.memory_space<vmem>>, vector<8x8xf32>,
    %92 = vector.extract_strided_slice %11 {offsets = [0, 24], sizes = [8, 8], strides = [1, 1]} : vector<8x32xf32> to vector<8x8xf32>
    %93 = tpu.transpose %92, [1, 0] : vector<8x8xf32> -> vector<8x8xf32>
    %c3 = arith.constant 3 : index
    %94 = arith.index_cast %arg1 : i32 to index
    %c0_58 = arith.constant 0 : index
    %c0_59 = arith.constant 0 : index
    %95 = vector.load %arg12[%c3, %94, %c0_58, %c0_59] : memref<4x1x8x8xf32, #tpu.memory_space<vmem>>, vector<1x1x8x8xf32>
    %96 = vector.shape_cast %95 : vector<1x1x8x8xf32> to vector<8x8xf32>
    %97 = vector.shape_cast %93 : vector<8x8xf32> to vector<1x1x8x8xf32>
    tpu.vector_store %arg12[%c3, %94, %c0_58, %c0_59], %97 {strides = array<i32>} : memref<4x1x8x8xf32, #tpu.memory_space<vmem>>, vector<1x1x8x8xf32>,
    %98 = vector.extract_strided_slice %16 {offsets = [0, 24], sizes = [8, 8], strides = [1, 1]} : vector<8x32xf32> to vector<8x8xf32>
    %c3_60 = arith.constant 3 : index
    %99 = arith.index_cast %arg1 : i32 to index
    %c0_61 = arith.constant 0 : index
    %c0_62 = arith.constant 0 : index
    %100 = vector.load %arg13[%c3_60, %99, %c0_61, %c0_62] : memref<4x1x8x8xf32, #tpu.memory_space<vmem>>, vector<1x1x8x8xf32>
    %101 = vector.shape_cast %100 : vector<1x1x8x8xf32> to vector<8x8xf32>
    %102 = vector.shape_cast %98 : vector<8x8xf32> to vector<1x1x8x8xf32>
    tpu.vector_store %arg13[%c3_60, %99, %c0_61, %c0_62], %102 {strides = array<i32>} : memref<4x1x8x8xf32, #tpu.memory_space<vmem>>, vector<1x1x8x8xf32>,
    %103 = vector.extract_strided_slice %6 {offsets = [0, 24], sizes = [8, 8], strides = [1, 1]} : vector<8x32xf32> to vector<8x8xf32>
    %cst_63 = arith.constant 0xFF800000 : f32
    %104 = vector.broadcast %cst_63 : f32 to vector<8x1xf32>
    %cst_64 = arith.constant 0.000000e+00 : f32
    %105 = vector.broadcast %cst_64 : f32 to vector<8x1xf32>
    %cst_65 = arith.constant 0.000000e+00 : f32
    %106 = vector.broadcast %cst_65 : f32 to vector<8x8xf32>
    %c1_i32_66 = arith.constant 1 : i32
    %107 = arith.addi %arg1, %c1_i32_66 : i32
    %cst_67 = arith.constant -1.000000e+05 : f32
    %c0_i32_68 = arith.constant 0 : i32
    %108 = arith.subi %107, %c0_i32_68 : i32
    %109 = arith.addi %c0_i32_68, %108 : i32
    %c1_i32_69 = arith.constant 1 : i32
    %110:3 = scf.for %arg15 = %c0_i32_68 to %109 step %c1_i32_69 iter_args(%arg16 = %104, %arg17 = %105, %arg18 = %106) -> (vector<8x1xf32>, vector<8x1xf32>, vector<8x8xf32>)  : i32 {
      %c3_82 = arith.constant 3 : index
      %124 = arith.index_cast %arg15 : i32 to index
      %c0_83 = arith.constant 0 : index
      %c0_84 = arith.constant 0 : index
      %125 = vector.load %arg12[%c3_82, %124, %c0_83, %c0_84] : memref<4x1x8x8xf32, #tpu.memory_space<vmem>>, vector<1x1x8x8xf32>
      %126 = vector.shape_cast %125 : vector<1x1x8x8xf32> to vector<8x8xf32>
      %c3_85 = arith.constant 3 : index
      %127 = arith.index_cast %arg15 : i32 to index
      %c0_86 = arith.constant 0 : index
      %c0_87 = arith.constant 0 : index
      %128 = vector.load %arg13[%c3_85, %127, %c0_86, %c0_87] : memref<4x1x8x8xf32, #tpu.memory_space<vmem>>, vector<1x1x8x8xf32>
      %129 = vector.shape_cast %128 : vector<1x1x8x8xf32> to vector<8x8xf32>
      %cst_88 = arith.constant dense<0.000000e+00> : vector<8x8xf32>
      %130 = tpu.matmul %103, %126, %cst_88 {dimension_numbers = #tpu.dot_dimension_numbers<[1], [0], [0], [1], [0, 0, 1, 1], [], []>} : vector<8x8xf32>, vector<8x8xf32>, vector<8x8xf32> -> vector<8x8xf32>
      %131 = arith.subi %arg1, %arg15 : i32
      %c8_i32 = arith.constant 8 : i32
      %132 = arith.muli %131, %c8_i32 : i32
      %133 = vector.broadcast %132 : i32 to vector<8x8xi32>
      %134 = arith.cmpi sgt, %19, %133 : vector<8x8xi32>
      %135 = vector.broadcast %cst_67 : f32 to vector<8x8xf32>
      %136 = arith.select %134, %135, %130 : vector<8x8xi1>, vector<8x8xf32>
      %cst_89 = arith.constant dense<0xFF800000> : vector<8xf32>
      %137 = vector.multi_reduction <maximumf>, %136, %cst_89 [1] : vector<8x8xf32> to vector<8xf32>
      %138 = vector.shape_cast %137 : vector<8xf32> to vector<8x1xf32>
      %139 = arith.maximumf %arg16, %138 : vector<8x1xf32>
      %140 = arith.subf %arg16, %139 : vector<8x1xf32>
      %141 = math.exp %140 : vector<8x1xf32>
      %142 = vector.broadcast %139 : vector<8x1xf32> to vector<8x8xf32>
      %143 = arith.subf %136, %142 : vector<8x8xf32>
      %144 = math.exp %143 : vector<8x8xf32>
      %145 = arith.mulf %141, %arg17 : vector<8x1xf32>
      %cst_90 = arith.constant dense<0.000000e+00> : vector<8xf32>
      %146 = vector.multi_reduction <add>, %144, %cst_90 [1] : vector<8x8xf32> to vector<8xf32>
      %147 = vector.shape_cast %146 : vector<8xf32> to vector<8x1xf32>
      %148 = arith.addf %145, %147 : vector<8x1xf32>
      %149 = vector.broadcast %141 : vector<8x1xf32> to vector<8x8xf32>
      %150 = arith.mulf %149, %arg18 : vector<8x8xf32>
      %cst_91 = arith.constant dense<0.000000e+00> : vector<8x8xf32>
      %151 = tpu.matmul %144, %129, %cst_91 {dimension_numbers = #tpu.dot_dimension_numbers<[1], [0], [0], [1], [0, 0, 1, 1], [], []>} : vector<8x8xf32>, vector<8x8xf32>, vector<8x8xf32> -> vector<8x8xf32>
      %152 = arith.addf %150, %151 : vector<8x8xf32>
      scf.yield %139, %148, %152 : vector<8x1xf32>, vector<8x1xf32>, vector<8x8xf32>
    }
    %cst_70 = arith.constant 1.000000e+00 : f32
    %111 = vector.broadcast %cst_70 : f32 to vector<8x1xf32>
    %112 = arith.divf %111, %110#1 : vector<8x1xf32>
    %113 = vector.broadcast %112 : vector<8x1xf32> to vector<8x8xf32>
    %114 = arith.mulf %110#2, %113 : vector<8x8xf32>
    %c0_71 = arith.constant 0 : index
    %c24 = arith.constant 24 : index
    %115 = vector.load %arg14[%c0_71, %c24] : memref<8x32xf32, #tpu.memory_space<vmem>>, vector<8x8xf32>
    tpu.vector_store %arg14[%c0_71, %c24], %114 {strides = array<i32>} : memref<8x32xf32, #tpu.memory_space<vmem>>, vector<8x8xf32>,
    %c0_72 = arith.constant 0 : index
    %c0_73 = arith.constant 0 : index
    %116 = vector.load %arg14[%c0_72, %c0_73] : memref<8x32xf32, #tpu.memory_space<vmem>>, vector<8x32xf32>
    %c0_74 = arith.constant 0 : index
    %c0_75 = arith.constant 0 : index
    %117 = vector.load %arg6[%c0_74, %c0_75] : memref<32x32xf32, #tpu.memory_space<vmem>>, vector<32x32xf32>
    %cst_76 = arith.constant dense<0.000000e+00> : vector<8x32xf32>
    %118 = tpu.matmul %116, %117, %cst_76 {dimension_numbers = #tpu.dot_dimension_numbers<[1], [0], [0], [1], [0, 0, 1, 1], [], []>} : vector<8x32xf32>, vector<32x32xf32>, vector<8x32xf32> -> vector<8x32xf32>
    %c0_77 = arith.constant 0 : index
    %c0_78 = arith.constant 0 : index
    %119 = vector.load %arg10[%c0_77, %c0_78] : memref<1x32xf32, #tpu.memory_space<vmem>>, vector<1x32xf32>
    %120 = vector.broadcast %119 : vector<1x32xf32> to vector<8x32xf32>
    %121 = arith.addf %118, %120 : vector<8x32xf32>
    %122 = vector.shape_cast %121 : vector<8x32xf32> to vector<1x8x32xf32>
    %c0_79 = arith.constant 0 : index
    %c0_80 = arith.constant 0 : index
    %c0_81 = arith.constant 0 : index
    %123 = vector.load %arg11[%c0_79, %c0_80, %c0_81] : memref<1x8x32xf32, #tpu.memory_space<vmem>>, vector<1x8x32xf32>
    tpu.vector_store %arg11[%c0_79, %c0_80, %c0_81], %122 {strides = array<i32>} : memref<1x8x32xf32, #tpu.memory_space<vmem>>, vector<1x8x32xf32>,
    return
  }
  func.func @transform_0(%arg0: i32, %arg1: i32) -> (i32, i32, i32) {
    %c0_i32 = arith.constant 0 : i32
    %c0_i32_0 = arith.constant 0 : i32
    return %arg0, %arg1, %c0_i32 : i32, i32, i32
  }
  func.func @transform_1(%arg0: i32, %arg1: i32) -> (i32, i32) {
    %c0_i32 = arith.constant 0 : i32
    %c0_i32_0 = arith.constant 0 : i32
    %c0_i32_1 = arith.constant 0 : i32
    return %c0_i32, %c0_i32_0 : i32, i32
  }
  func.func @transform_2(%arg0: i32, %arg1: i32) -> (i32, i32) {
    %c0_i32 = arith.constant 0 : i32
    %c0_i32_0 = arith.constant 0 : i32
    %c0_i32_1 = arith.constant 0 : i32
    return %c0_i32, %c0_i32_0 : i32, i32
  }
  func.func @transform_3(%arg0: i32, %arg1: i32) -> (i32, i32) {
    %c0_i32 = arith.constant 0 : i32
    %c0_i32_0 = arith.constant 0 : i32
    %c0_i32_1 = arith.constant 0 : i32
    return %c0_i32, %c0_i32_0 : i32, i32
  }
  func.func @transform_4(%arg0: i32, %arg1: i32) -> (i32, i32) {
    %c0_i32 = arith.constant 0 : i32
    %c0_i32_0 = arith.constant 0 : i32
    %c0_i32_1 = arith.constant 0 : i32
    return %c0_i32, %c0_i32_0 : i32, i32
  }
  func.func @transform_5(%arg0: i32, %arg1: i32) -> (i32, i32) {
    %c0_i32 = arith.constant 0 : i32
    %c0_i32_0 = arith.constant 0 : i32
    %c0_i32_1 = arith.constant 0 : i32
    return %c0_i32, %c0_i32_0 : i32, i32
  }
  func.func @transform_6(%arg0: i32, %arg1: i32) -> (i32, i32) {
    %c0_i32 = arith.constant 0 : i32
    %c0_i32_0 = arith.constant 0 : i32
    %c0_i32_1 = arith.constant 0 : i32
    return %c0_i32, %c0_i32_0 : i32, i32
  }
  func.func @transform_7(%arg0: i32, %arg1: i32) -> (i32, i32) {
    %c0_i32 = arith.constant 0 : i32
    %c0_i32_0 = arith.constant 0 : i32
    %c0_i32_1 = arith.constant 0 : i32
    return %c0_i32, %c0_i32_0 : i32, i32
  }
  func.func @transform_8(%arg0: i32, %arg1: i32) -> (i32, i32) {
    %c0_i32 = arith.constant 0 : i32
    %c0_i32_0 = arith.constant 0 : i32
    %c0_i32_1 = arith.constant 0 : i32
    return %c0_i32, %c0_i32_0 : i32, i32
  }
  func.func @transform_9(%arg0: i32, %arg1: i32) -> (i32, i32, i32) {
    %c0_i32 = arith.constant 0 : i32
    %c0_i32_0 = arith.constant 0 : i32
    return %arg0, %arg1, %c0_i32 : i32, i32, i32
  }
}

</mosaic_0001>

<llo_original>
// kernel: tpu_custom_call.1
$region0: #{tpu_custom_call.1}
  #allocation0 [shape = 'u32[]', space=smem, size = 0x4, offset = 0x4, fixed_abs, tag = 'smem constant byte address 0x4 - core index']
  #allocation1 [shape = 'u32[144,128]{1,0:T(1,128)}', space=vmem, size = 0x12000, scoped, tag = 'internal scratch']
  #allocation2 [shape = 'f32[4,1,8,8]{3,2,1,0:T(8,128)}', space=vmem, size = 0x4000, scoped, tag = 'scratch operand']
  #allocation3 [shape = 'f32[4,1,8,8]{3,2,1,0:T(8,128)}', space=vmem, size = 0x4000, scoped, tag = 'scratch operand']
  #allocation4 [shape = 'f32[8,32]{1,0:T(8,128)}', space=vmem, size = 0x1000, scoped, tag = 'scratch operand']
  %s0 = inlined_call_operand.hbm [shape: f32[2,8,32], index: 0, kind: input, shape index: {}]
  %s1 = inlined_call_operand.hbm [shape: f32[32,32], index: 1, kind: input, shape index: {}]
  %s2 = inlined_call_operand.hbm [shape: f32[32,32], index: 2, kind: input, shape index: {}]
  %s3 = inlined_call_operand.hbm [shape: f32[32,32], index: 3, kind: input, shape index: {}]
  %s4 = inlined_call_operand.hbm [shape: f32[32,32], index: 4, kind: input, shape index: {}]
  %s5 = inlined_call_operand.vmem [shape: f32[1,32], index: 5, kind: input, shape index: {}]
  %s6 = inlined_call_operand.vmem [shape: f32[1,32], index: 6, kind: input, shape index: {}]
  %s7 = inlined_call_operand.vmem [shape: f32[1,32], index: 7, kind: input, shape index: {}]
  %s8 = inlined_call_operand.vmem [shape: f32[1,32], index: 8, kind: input, shape index: {}]
  %s9 = inlined_call_operand.hbm [shape: f32[2,8,32], index: 9, kind: output, shape index: {}]
  %s10 = sld [smem:[#allocation0]]
  $region117: #{tpu_custom_call.1} parent=0
    _
  %s12 = ssub.s32 1, %s10
  %s13 = scalar_select 0, %s12, %s10
  $region1: #{tpu_custom_call.1} parent=0
    #allocation5 [shape = 'u8[8192]{0}', space=vmem, size = 0x2000, scoped, tag = 'input window, operand 0']
    #allocation6 [shape = 's32[2]{0}', space=sflag, size = 0x8, scoped, tag = 'scoped memory for tpu_custom_call.1']
    #allocation7 [shape = 's32[2]{0}', space=sflag, size = 0x8, scoped, tag = 'scoped memory for tpu_custom_call.1']
    #allocation8 [shape = 'u8[16384]{0}', space=vmem, size = 0x4000, scoped, tag = 'input window, operand 1, single buffered']
    #allocation9 [shape = 's32[1]{0}', space=sflag, size = 0x4, scoped, tag = 'scoped memory for tpu_custom_call.1']
    #allocation10 [shape = 'u8[16384]{0}', space=vmem, size = 0x4000, scoped, tag = 'input window, operand 2, single buffered']
    #allocation11 [shape = 'u8[16384]{0}', space=vmem, size = 0x4000, scoped, tag = 'input window, operand 3, single buffered']
    #allocation12 [shape = 's32[1]{0}', space=sflag, size = 0x4, scoped, tag = 'scoped memory for tpu_custom_call.1']
    #allocation13 [shape = 'u8[16384]{0}', space=vmem, size = 0x4000, scoped, tag = 'input window, operand 4, single buffered']
    #allocation14 [shape = 'u8[8192]{0}', space=vmem, size = 0x2000, scoped, tag = 'output window, operand 0']
    %14 = vsyncpa [#allocation6], 0
    %s15 = scalar_lea.sflag [#allocation6], 1
    %16 = vsyncpa %s15, 0
    %17 = vsyncpa [#allocation9], 0
    %18 = vsyncpa [#allocation12], 0
    %19 = vsyncpa [#allocation7], 0
    %s20 = scalar_lea.sflag [#allocation7], 1
    %21 = vsyncpa %s20, 0
    loop: start=0, step=1, limit=4
    $region2: #{tpu_custom_call.1} parent=1 // loop_pre_header
      _
    $region3: #{tpu_custom_call.1} parent=1 // loop_header
      %s23 = sphi 0, %s27
      %p24 = scmp.ge.s32.totalorder %s23, 4
      %s30 = sphi 0, %s42
      %s31 = sphi 0, %s38
      %s32 = sphi 0, %s30
      %s33 = sphi 0, %s31
      %s34 = sphi 0, %s32
      %s35 = sphi 0, %s33
      %s47 = sphi 0, %s49
      %s50 = sphi 0, %s47
      %s51 = sphi 0, %s50
      %s67 = sphi 0, %s51
      %s71 = sphi 0, %s71
      %s73 = sphi 0, %s71
      %s74 = sphi 0, %s73
      %s88 = sphi 0, %s74
      %s92 = sphi 0, %s92
      %s94 = sphi 0, %s92
      %s95 = sphi 0, %s94
      %s109 = sphi 0, %s95
      %s113 = sphi 0, %s113
      %s115 = sphi 0, %s113
      %s116 = sphi 0, %s115
      %s130 = sphi 0, %s116
      %s134 = sphi 0, %s134
      %s136 = sphi 0, %s134
      %s137 = sphi 0, %s136
      %s151 = sphi 0, %s137
      %s155 = sphi 0, %s155
      %s157 = sphi 0, %s155
      %s158 = sphi 0, %s157
      %s172 = sphi 0, %s158
      %s176 = sphi 0, %s176
      %s178 = sphi 0, %s176
      %s179 = sphi 0, %s178
      %s193 = sphi 0, %s179
      %s197 = sphi 0, %s197
      %s199 = sphi 0, %s197
      %s200 = sphi 0, %s199
      %s214 = sphi 0, %s200
      %s218 = sphi 0, %s218
      %s220 = sphi 0, %s218
      %s221 = sphi 0, %s220
      %s235 = sphi 0, %s221
      %s243 = sphi 0, %s245
      %s246 = sphi 0, %s243
      %s247 = sphi 0, %s246
      %s263 = sphi 0, %s247
    $region4: #{tpu_custom_call.1} parent=1 // loop_header_branch
      %26 = sbr.rel (%p24) target = $region8
    $region5: #{tpu_custom_call.1} parent=1 // loop_body
      %s28 = ssub.s32 %s23, 1
      %s29 = ssub.s32 %s23, 2
      %s36 = sadd.s32 1, %s31
      %p37 = scmp.ge.s32.totalorder %s36, 1
      %s38 = scalar_select %p37, 0, %s36
      %s39 = sadd.s32 1, %s30
      %s40 = scalar_select %p37, %s39, %s30
      %p41 = scmp.ge.s32.totalorder %s40, 2
      %s42 = scalar_select %p41, 0, %s40
      %s43 = ssub.s32 %s30, %s42
      %s44 = ssub.s32 %s31, %s38
      %s45 = sor.u32 %s43, %s44
      %p46 = scmp.eq.s32.totalorder %s45, 0
      %s48 = sadd.s32 %s47, 1
      %s49 = scalar_select %p46, %s47, %s48
      %p52 = pneg %p46
      %p53 = scmp.eq.s32.totalorder %s23, 1
      %p54 = por %p52, %p53
      %p55 = scmp.ne.s32.totalorder %s47, %s50
      %p56 = scmp.eq.s32.totalorder %s23, 0
      %p57 = por %p55, %p56
      %p58 = scmp.ne.s32.totalorder %s47, %s50
      %p59 = scmp.eq.s32.totalorder %s28, 1
      %p60 = por %p58, %p59
      %p61 = scmp.ne.s32.totalorder %s50, %s51
      %p62 = scmp.eq.s32.totalorder %s28, 0
      %p63 = por %p61, %p62
      %p64 = scmp.ne.s32.totalorder %s50, %s51
      %p65 = scmp.eq.s32.totalorder %s29, 1
      %p66 = por %p64, %p65
      %p68 = scmp.ne.s32.totalorder %s51, %s67
      %p69 = scmp.eq.s32.totalorder %s29, 0
      %p70 = por %p68, %p69
      %s72 = sadd.s32 %s71, 1
      %p75 = scmp.eq.s32.totalorder %s23, 1
      %p76 = scmp.ne.s32.totalorder %s71, %s73
      %p77 = scmp.eq.s32.totalorder %s23, 0
      %p78 = por %p76, %p77
      %p79 = scmp.ne.s32.totalorder %s71, %s73
      %p80 = scmp.eq.s32.totalorder %s28, 1
      %p81 = por %p79, %p80
      %p82 = scmp.ne.s32.totalorder %s73, %s74
      %p83 = scmp.eq.s32.totalorder %s28, 0
      %p84 = por %p82, %p83
      %p85 = scmp.ne.s32.totalorder %s73, %s74
      %p86 = scmp.eq.s32.totalorder %s29, 1
      %p87 = por %p85, %p86
      %p89 = scmp.ne.s32.totalorder %s74, %s88
      %p90 = scmp.eq.s32.totalorder %s29, 0
      %p91 = por %p89, %p90
      %s93 = sadd.s32 %s92, 1
      %p96 = scmp.eq.s32.totalorder %s23, 1
      %p97 = scmp.ne.s32.totalorder %s92, %s94
      %p98 = scmp.eq.s32.totalorder %s23, 0
      %p99 = por %p97, %p98
      %p100 = scmp.ne.s32.totalorder %s92, %s94
      %p101 = scmp.eq.s32.totalorder %s28, 1
      %p102 = por %p100, %p101
      %p103 = scmp.ne.s32.totalorder %s94, %s95
      %p104 = scmp.eq.s32.totalorder %s28, 0
      %p105 = por %p103, %p104
      %p106 = scmp.ne.s32.totalorder %s94, %s95
      %p107 = scmp.eq.s32.totalorder %s29, 1
      %p108 = por %p106, %p107
      %p110 = scmp.ne.s32.totalorder %s95, %s109
      %p111 = scmp.eq.s32.totalorder %s29, 0
      %p112 = por %p110, %p111
      %s114 = sadd.s32 %s113, 1
      %p117 = scmp.eq.s32.totalorder %s23, 1
      %p118 = scmp.ne.s32.totalorder %s113, %s115
      %p119 = scmp.eq.s32.totalorder %s23, 0
      %p120 = por %p118, %p119
      %p121 = scmp.ne.s32.totalorder %s113, %s115
      %p122 = scmp.eq.s32.totalorder %s28, 1
      %p123 = por %p121, %p122
      %p124 = scmp.ne.s32.totalorder %s115, %s116
      %p125 = scmp.eq.s32.totalorder %s28, 0
      %p126 = por %p124, %p125
      %p127 = scmp.ne.s32.totalorder %s115, %s116
      %p128 = scmp.eq.s32.totalorder %s29, 1
      %p129 = por %p127, %p128
      %p131 = scmp.ne.s32.totalorder %s116, %s130
      %p132 = scmp.eq.s32.totalorder %s29, 0
      %p133 = por %p131, %p132
      %s135 = sadd.s32 %s134, 1
      %p138 = scmp.eq.s32.totalorder %s23, 1
      %p139 = scmp.ne.s32.totalorder %s134, %s136
      %p140 = scmp.eq.s32.totalorder %s23, 0
      %p141 = por %p139, %p140
      %p142 = scmp.ne.s32.totalorder %s134, %s136
      %p143 = scmp.eq.s32.totalorder %s28, 1
      %p144 = por %p142, %p143
      %p145 = scmp.ne.s32.totalorder %s136, %s137
      %p146 = scmp.eq.s32.totalorder %s28, 0
      %p147 = por %p145, %p146
      %p148 = scmp.ne.s32.totalorder %s136, %s137
      %p149 = scmp.eq.s32.totalorder %s29, 1
      %p150 = por %p148, %p149
      %p152 = scmp.ne.s32.totalorder %s137, %s151
      %p153 = scmp.eq.s32.totalorder %s29, 0
      %p154 = por %p152, %p153
      %s156 = sadd.s32 %s155, 1
      %p159 = scmp.eq.s32.totalorder %s23, 1
      %p160 = scmp.ne.s32.totalorder %s155, %s157
      %p161 = scmp.eq.s32.totalorder %s23, 0
      %p162 = por %p160, %p161
      %p163 = scmp.ne.s32.totalorder %s155, %s157
      %p164 = scmp.eq.s32.totalorder %s28, 1
      %p165 = por %p163, %p164
      %p166 = scmp.ne.s32.totalorder %s157, %s158
      %p167 = scmp.eq.s32.totalorder %s28, 0
      %p168 = por %p166, %p167
      %p169 = scmp.ne.s32.totalorder %s157, %s158
      %p170 = scmp.eq.s32.totalorder %s29, 1
      %p171 = por %p169, %p170
      %p173 = scmp.ne.s32.totalorder %s158, %s172
      %p174 = scmp.eq.s32.totalorder %s29, 0
      %p175 = por %p173, %p174
      %s177 = sadd.s32 %s176, 1
      %p180 = scmp.eq.s32.totalorder %s23, 1
      %p181 = scmp.ne.s32.totalorder %s176, %s178
      %p182 = scmp.eq.s32.totalorder %s23, 0
      %p183 = por %p181, %p182
      %p184 = scmp.ne.s32.totalorder %s176, %s178
      %p185 = scmp.eq.s32.totalorder %s28, 1
      %p186 = por %p184, %p185
      %p187 = scmp.ne.s32.totalorder %s178, %s179
      %p188 = scmp.eq.s32.totalorder %s28, 0
      %p189 = por %p187, %p188
      %p190 = scmp.ne.s32.totalorder %s178, %s179
      %p191 = scmp.eq.s32.totalorder %s29, 1
      %p192 = por %p190, %p191
      %p194 = scmp.ne.s32.totalorder %s179, %s193
      %p195 = scmp.eq.s32.totalorder %s29, 0
      %p196 = por %p194, %p195
      %s198 = sadd.s32 %s197, 1
      %p201 = scmp.eq.s32.totalorder %s23, 1
      %p202 = scmp.ne.s32.totalorder %s197, %s199
      %p203 = scmp.eq.s32.totalorder %s23, 0
      %p204 = por %p202, %p203
      %p205 = scmp.ne.s32.totalorder %s197, %s199
      %p206 = scmp.eq.s32.totalorder %s28, 1
      %p207 = por %p205, %p206
      %p208 = scmp.ne.s32.totalorder %s199, %s200
      %p209 = scmp.eq.s32.totalorder %s28, 0
      %p210 = por %p208, %p209
      %p211 = scmp.ne.s32.totalorder %s199, %s200
      %p212 = scmp.eq.s32.totalorder %s29, 1
      %p213 = por %p211, %p212
      %p215 = scmp.ne.s32.totalorder %s200, %s214
      %p216 = scmp.eq.s32.totalorder %s29, 0
      %p217 = por %p215, %p216
      %s219 = sadd.s32 %s218, 1
      %p222 = scmp.eq.s32.totalorder %s23, 1
      %p223 = scmp.ne.s32.totalorder %s218, %s220
      %p224 = scmp.eq.s32.totalorder %s23, 0
      %p225 = por %p223, %p224
      %p226 = scmp.ne.s32.totalorder %s218, %s220
      %p227 = scmp.eq.s32.totalorder %s28, 1
      %p228 = por %p226, %p227
      %p229 = scmp.ne.s32.totalorder %s220, %s221
      %p230 = scmp.eq.s32.totalorder %s28, 0
      %p231 = por %p229, %p230
      %p232 = scmp.ne.s32.totalorder %s220, %s221
      %p233 = scmp.eq.s32.totalorder %s29, 1
      %p234 = por %p232, %p233
      %p236 = scmp.ne.s32.totalorder %s221, %s235
      %p237 = scmp.eq.s32.totalorder %s29, 0
      %p238 = por %p236, %p237
      %s239 = ssub.s32 %s30, %s42
      %s240 = ssub.s32 %s31, %s38
      %s241 = sor.u32 %s239, %s240
      %p242 = scmp.eq.s32.totalorder %s241, 0
      %s244 = sadd.s32 %s243, 1
      %s245 = scalar_select %p242, %s243, %s244
      %p248 = pneg %p242
      %p249 = scmp.eq.s32.totalorder %s23, 1
      %p250 = por %p248, %p249
      %p251 = scmp.ne.s32.totalorder %s243, %s246
      %p252 = scmp.eq.s32.totalorder %s23, 0
      %p253 = por %p251, %p252
      %p254 = scmp.ne.s32.totalorder %s243, %s246
      %p255 = scmp.eq.s32.totalorder %s28, 1
      %p256 = por %p254, %p255
      %p257 = scmp.ne.s32.totalorder %s246, %s247
      %p258 = scmp.eq.s32.totalorder %s28, 0
      %p259 = por %p257, %p258
      %p260 = scmp.ne.s32.totalorder %s246, %s247
      %p261 = scmp.eq.s32.totalorder %s29, 1
      %p262 = por %p260, %p261
      %p264 = scmp.ne.s32.totalorder %s247, %s263
      %p265 = scmp.eq.s32.totalorder %s29, 0
      %p266 = por %p264, %p265
      %p267 = scmp.le.s32.totalorder 1, %s23
      %p268 = scmp.lt.s32.totalorder %s23, 3
      %p269 = pnand %p267, %p268
      %p270 = pneg %p269
      // Predicated region
      $region9: #{tpu_custom_call.1} parent=5 // pred_check
        _
      $region10: #{tpu_custom_call.1} parent=5 // pred_check_branch
        %272 = sbr.rel (%p269) target = $region12
      $region11: #{tpu_custom_call.1} parent=5 // pred_region
        %s273 = ssub.s32 %s23, 1
        // Predicated region
        $region13: #{tpu_custom_call.1} parent=11 // pred_check
          %p274 = pneg %p84
        $region14: #{tpu_custom_call.1} parent=11 // pred_check_branch
          %276 = sbr.rel (%p274) target = $region16
        $region15: #{tpu_custom_call.1} parent=11 // pred_region
          %s278 = ssub.s32 512, 512
          %279 = vsyncadd [#allocation9], %s278
          %s280 = sshll.u32 [#allocation8], 4
          %s281 = int_to_ptr.vmem [resolvable:$true] %s280
          %286 = dma.hbm_to_vmem [thread:$0]  %s1, 512, %s281, [#allocation9], 128, 128, 8
        $region16: #{tpu_custom_call.1} parent=11 // pred_fallthru
          _
        // Predicated region
        $region17: #{tpu_custom_call.1} parent=11 // pred_check
          %p287 = pneg %p105
        $region18: #{tpu_custom_call.1} parent=11 // pred_check_branch
          %289 = sbr.rel (%p287) target = $region20
        $region19: #{tpu_custom_call.1} parent=11 // pred_region
          %s291 = ssub.s32 512, 512
          %292 = vsyncadd [#allocation9], %s291
          %s293 = sshll.u32 [#allocation10], 4
          %s294 = int_to_ptr.vmem [resolvable:$true] %s293
          %299 = dma.hbm_to_vmem [thread:$0]  %s2, 512, %s294, [#allocation9], 128, 128, 8
        $region20: #{tpu_custom_call.1} parent=11 // pred_fallthru
          _
        // Predicated region
        $region21: #{tpu_custom_call.1} parent=11 // pred_check
          %p300 = pneg %p126
        $region22: #{tpu_custom_call.1} parent=11 // pred_check_branch
          %302 = sbr.rel (%p300) target = $region24
        $region23: #{tpu_custom_call.1} parent=11 // pred_region
          %s304 = ssub.s32 512, 512
          %305 = vsyncadd [#allocation12], %s304
          %s306 = sshll.u32 [#allocation11], 4
          %s307 = int_to_ptr.vmem [resolvable:$true] %s306
          %312 = dma.hbm_to_vmem [thread:$0]  %s3, 512, %s307, [#allocation12], 128, 128, 8
        $region24: #{tpu_custom_call.1} parent=11 // pred_fallthru
          _
        // Predicated region
        $region25: #{tpu_custom_call.1} parent=11 // pred_check
          %p313 = pneg %p147
        $region26: #{tpu_custom_call.1} parent=11 // pred_check_branch
          %315 = sbr.rel (%p313) target = $region28
        $region27: #{tpu_custom_call.1} parent=11 // pred_region
          %s317 = ssub.s32 512, 512
          %318 = vsyncadd [#allocation12], %s317
          %s319 = sshll.u32 [#allocation13], 4
          %s320 = int_to_ptr.vmem [resolvable:$true] %s319
          %325 = dma.hbm_to_vmem [thread:$0]  %s4, 512, %s320, [#allocation12], 128, 128, 8
        $region28: #{tpu_custom_call.1} parent=11 // pred_fallthru
          _
        // Predicated region
        $region29: #{tpu_custom_call.1} parent=11 // pred_check
          %p326 = pneg %p168
        $region30: #{tpu_custom_call.1} parent=11 // pred_check_branch
          %328 = sbr.rel (%p326) target = $region32
        $region31: #{tpu_custom_call.1} parent=11 // pred_region
          _
        $region32: #{tpu_custom_call.1} parent=11 // pred_fallthru
          _
        // Predicated region
        $region33: #{tpu_custom_call.1} parent=11 // pred_check
          %p329 = pneg %p189
        $region34: #{tpu_custom_call.1} parent=11 // pred_check_branch
          %331 = sbr.rel (%p329) target = $region36
        $region35: #{tpu_custom_call.1} parent=11 // pred_region
          _
        $region36: #{tpu_custom_call.1} parent=11 // pred_fallthru
          _
        // Predicated region
        $region37: #{tpu_custom_call.1} parent=11 // pred_check
          %p332 = pneg %p210
        $region38: #{tpu_custom_call.1} parent=11 // pred_check_branch
          %334 = sbr.rel (%p332) target = $region40
        $region39: #{tpu_custom_call.1} parent=11 // pred_region
          _
        $region40: #{tpu_custom_call.1} parent=11 // pred_fallthru
          _
        // Predicated region
        $region41: #{tpu_custom_call.1} parent=11 // pred_check
          %p335 = pneg %p231
        $region42: #{tpu_custom_call.1} parent=11 // pred_check_branch
          %337 = sbr.rel (%p335) target = $region44
        $region43: #{tpu_custom_call.1} parent=11 // pred_region
          _
        $region44: #{tpu_custom_call.1} parent=11 // pred_fallthru
          _
      $region12: #{tpu_custom_call.1} parent=5 // pred_fallthru
        _
      %p338 = scmp.lt.s32.totalorder %s23, 2
      // Predicated region
      $region45: #{tpu_custom_call.1} parent=5 // pred_check
        %p339 = pneg %p338
      $region46: #{tpu_custom_call.1} parent=5 // pred_check_branch
        %341 = sbr.rel (%p339) target = $region48
      $region47: #{tpu_custom_call.1} parent=5 // pred_region
        // Predicated region
        $region49: #{tpu_custom_call.1} parent=47 // pred_check
          %p342 = pneg %p57
        $region50: #{tpu_custom_call.1} parent=47 // pred_check_branch
          %344 = sbr.rel (%p342) target = $region52
        $region51: #{tpu_custom_call.1} parent=47 // pred_region
          %s345 = sand.u32 %s47, 1
          %s346 = scalar_lea.sflag [#allocation6], %s345
          %s347 = sand.u32 %s47, 1
          %s348 = smul.addr %s347, 8
          %s349 = scalar_lea.vmem [#allocation5], %s348
          %s351 = ssub.s32 128, 128
          %352 = vsyncadd %s346, %s351
          %s353 = sadd.s32 %s31, %s30
          %s354 = smul.addr %s353, 128
          %s355 = scalar_lea.hbm %s0, %s354
          %s357 = sshll.u32 %s349, 4
          %s358 = int_to_ptr.vmem [resolvable:$true] %s357
          %360 = dma.hbm_to_vmem [thread:$0]  %s355, 128, %s358, %s346
        $region52: #{tpu_custom_call.1} parent=47 // pred_fallthru
          _
      $region48: #{tpu_custom_call.1} parent=5 // pred_fallthru
        _
      %p361 = scmp.le.s32.totalorder 1, %s23
      %p362 = scmp.lt.s32.totalorder %s23, 3
      %p363 = pnand %p361, %p362
      %p364 = pneg %p363
      // Predicated region
      $region53: #{tpu_custom_call.1} parent=5 // pred_check
        _
      $region54: #{tpu_custom_call.1} parent=5 // pred_check_branch
        %366 = sbr.rel (%p363) target = $region56
      $region55: #{tpu_custom_call.1} parent=5 // pred_region
        %s367 = ssub.s32 %s23, 1
        %s368 = sand.u32 %s50, 1
        %s369 = scalar_lea.sflag [#allocation6], %s368
        %s370 = sand.u32 %s50, 1
        %s371 = smul.addr %s370, 8
        %s372 = scalar_lea.vmem [#allocation5], %s371
        // Predicated region
        $region57: #{tpu_custom_call.1} parent=55 // pred_check
          %p373 = pneg %p63
        $region58: #{tpu_custom_call.1} parent=55 // pred_check_branch
          %375 = sbr.rel (%p373) target = $region60
        $region59: #{tpu_custom_call.1} parent=55 // pred_region
          %376 = dma.done %s369, 128
        $region60: #{tpu_custom_call.1} parent=55 // pred_fallthru
          _
        // Predicated region
        $region61: #{tpu_custom_call.1} parent=55 // pred_check
          %p377 = pneg %p84
        $region62: #{tpu_custom_call.1} parent=55 // pred_check_branch
          %379 = sbr.rel (%p377) target = $region64
        $region63: #{tpu_custom_call.1} parent=55 // pred_region
          %380 = dma.done [#allocation9], 512
        $region64: #{tpu_custom_call.1} parent=55 // pred_fallthru
          _
        // Predicated region
        $region65: #{tpu_custom_call.1} parent=55 // pred_check
          %p381 = pneg %p105
        $region66: #{tpu_custom_call.1} parent=55 // pred_check_branch
          %383 = sbr.rel (%p381) target = $region68
        $region67: #{tpu_custom_call.1} parent=55 // pred_region
          %384 = dma.done [#allocation9], 512
        $region68: #{tpu_custom_call.1} parent=55 // pred_fallthru
          _
        // Predicated region
        $region69: #{tpu_custom_call.1} parent=55 // pred_check
          %p385 = pneg %p126
        $region70: #{tpu_custom_call.1} parent=55 // pred_check_branch
          %387 = sbr.rel (%p385) target = $region72
        $region71: #{tpu_custom_call.1} parent=55 // pred_region
          %388 = dma.done [#allocation12], 512
        $region72: #{tpu_custom_call.1} parent=55 // pred_fallthru
          _
        // Predicated region
        $region73: #{tpu_custom_call.1} parent=55 // pred_check
          %p389 = pneg %p147
        $region74: #{tpu_custom_call.1} parent=55 // pred_check_branch
          %391 = sbr.rel (%p389) target = $region76
        $region75: #{tpu_custom_call.1} parent=55 // pred_region
          %392 = dma.done [#allocation12], 512
        $region76: #{tpu_custom_call.1} parent=55 // pred_fallthru
          _
        %s393 = sand.u32 %s50, 1
        %s394 = scalar_lea.sflag [#allocation6], %s393
        %s395 = sand.u32 %s50, 1
        %s396 = smul.addr %s395, 8
        %s397 = scalar_lea.vmem [#allocation5], %s396
        %p398 = pneg %p63
        %p399 = pneg %p60
        %p400 = pneg %p84
        %p401 = pneg %p81
        %p402 = pneg %p105
        %p403 = pneg %p102
        %p404 = pneg %p126
        %p405 = pneg %p123
        %p406 = pneg %p147
        %p407 = pneg %p144
        %p408 = pneg %p168
        %p409 = pneg %p165
        %p410 = pneg %p189
        %p411 = pneg %p186
        %p412 = pneg %p210
        %p413 = pneg %p207
        %p414 = pneg %p231
        %p415 = pneg %p228
        %p416 = pneg %p259
        %p417 = pneg %p256
        %s418 = sand.u32 %s246, 1
        %s419 = scalar_lea.sflag [#allocation7], %s418
        %s420 = sand.u32 %s246, 1
        %s421 = smul.addr %s420, 8
        %s422 = scalar_lea.vmem [#allocation14], %s421
        %v423 = vld [vmem:[%s372] sm:$0xff]
        %v424 = vld [vmem:[#allocation8] sm:$0xff]
        %v425 = vld [vmem:[#allocation8 + $0x8] sm:$0xff]
        %v426 = vld [vmem:[#allocation8 + $0x10] sm:$0xff]
        %v427 = vld [vmem:[#allocation8 + $0x18] sm:$0xff]
        %v428 = vld [vmem:[%s5] sm:$0x1]
        %v430 = vlaneseq
        %v431 = vshrl.u32 %v430, 7
        %v432 = vsub.s32 0, %v431
        %v433 = vrot.slane %v428, %v432
        %vm435 = vcmask 261120
        %v437 = vsel %vm435, %v423, 0
        %439 = vmatprep.subr.mxu0 0.0
        %440 = vmatpush1.msra.mxu0 %v424
        %441 = vmatprep.subr.mxu0 0.0
        %442 = vmatpush1.msra.mxu0 %v425
        %443 = vmatprep.subr.mxu0 0.0
        %444 = vmatpush1.msra.mxu0 %v426
        %445 = vmatprep.subr.mxu0 0.0
        %446 = vmatpush1.msra.mxu0 %v427
        %447 = vmatprep.subr.mxu0 0.0
        %448 = vmatpush1.msra.mxu0 0.0
        %449 = vmatprep.subr.mxu0 0.0
        %450 = vmatpush1.msra.mxu0 0.0
        %451 = vmatprep.subr.mxu0 0.0
        %452 = vmatpush1.msra.mxu0 0.0
        %453 = vmatprep.subr.mxu0 0.0
        %454 = vmatpush1.msra.mxu0 0.0
        %455 = vmatprep.subr.mxu0 0.0
        %456 = vmatpush1.msra.mxu0 0.0
        %457 = vmatprep.subr.mxu0 0.0
        %458 = vmatpush1.msra.mxu0 0.0
        %459 = vmatprep.subr.mxu0 0.0
        %460 = vmatpush1.msra.mxu0 0.0
        %461 = vmatprep.subr.mxu0 0.0
        %462 = vmatpush1.msra.mxu0 0.0
        %463 = vmatprep.subr.mxu0 0.0
        %464 = vmatpush1.msra.mxu0 0.0
        %465 = vmatprep.subr.mxu0 0.0
        %466 = vmatpush1.msra.mxu0 0.0
        %467 = vmatprep.subr.mxu0 0.0
        %468 = vmatpush1.msra.mxu0 0.0
        %469 = vmatprep.subr.mxu0 0.0
        %470 = vmatpush1.msra.mxu0 0.0
        %471 = vmatprep.subr.mxu0 0.0
        %472 = vmatpush1.msra.mxu0 0.0
        %473 = vmatprep.subr.mxu0 0.0
        %474 = vmatpush1.msra.mxu0 0.0
        %475 = vmatprep.subr.mxu0 0.0
        %476 = vmatpush1.msra.mxu0 0.0
        %477 = vmatprep.subr.mxu0 0.0
        %478 = vmatpush1.msra.mxu0 0.0
        %479 = vmatprep.subr.mxu0 0.0
        %480 = vmatpush1.msra.mxu0 0.0
        %481 = vmatprep.subr.mxu0 0.0
        %482 = vmatpush1.msra.mxu0 0.0
        %483 = vmatprep.subr.mxu0 0.0
        %484 = vmatpush1.msra.mxu0 0.0
        %485 = vmatprep.subr.mxu0 0.0
        %486 = vmatpush1.msra.mxu0 0.0
        %487 = vmatprep.subr.mxu0 0.0
        %488 = vmatpush1.msra.mxu0 0.0
        %489 = vmatprep.subr.mxu0 0.0
        %490 = vmatpush1.msra.mxu0 0.0
        %491 = vmatprep.subr.mxu0 0.0
        %492 = vmatpush1.msra.mxu0 0.0
        %493 = vmatprep.subr.mxu0 0.0
        %494 = vmatpush1.msra.mxu0 0.0
        %495 = vmatprep.subr.mxu0 0.0
        %496 = vmatpush1.msra.mxu0 0.0
        %497 = vmatprep.subr.mxu0 0.0
        %498 = vmatpush1.msra.mxu0 0.0
        %499 = vmatprep.subr.mxu0 0.0
        %500 = vmatpush1.msra.mxu0 0.0
        %501 = vmatprep.subr.mxu0 0.0
        %502 = vmatpush1.msra.mxu0 0.0
        %503 = vmatprep.mubr.f32.mxu0 0.0
        %504 = vmatmul.mubr.f32.gmra.mrb[0].mxu0 %v437
        %v505 = vpop.f32.mrb[0].mxu0
        %v506 = vadd.f32 %v433, %v505
        %v507 = vpop.f32.mrb[0].mxu0
        %508 = vdwg.mxu0
        %v509 = vld [vmem:[#allocation10] sm:$0xff]
        %v510 = vld [vmem:[#allocation10 + $0x8] sm:$0xff]
        %v511 = vld [vmem:[#allocation10 + $0x10] sm:$0xff]
        %v512 = vld [vmem:[#allocation10 + $0x18] sm:$0xff]
        %v513 = vld [vmem:[%s6] sm:$0x1]
        %v515 = vlaneseq
        %v516 = vshrl.u32 %v515, 7
        %v517 = vsub.s32 0, %v516
        %v518 = vrot.slane %v513, %v517
        %520 = vmatprep.subr.mxu0 0.0
        %521 = vmatpush1.msra.mxu0 %v509
        %522 = vmatprep.subr.mxu0 0.0
        %523 = vmatpush1.msra.mxu0 %v510
        %524 = vmatprep.subr.mxu0 0.0
        %525 = vmatpush1.msra.mxu0 %v511
        %526 = vmatprep.subr.mxu0 0.0
        %527 = vmatpush1.msra.mxu0 %v512
        %528 = vmatprep.subr.mxu0 0.0
        %529 = vmatpush1.msra.mxu0 0.0
        %530 = vmatprep.subr.mxu0 0.0
        %531 = vmatpush1.msra.mxu0 0.0
        %532 = vmatprep.subr.mxu0 0.0
        %533 = vmatpush1.msra.mxu0 0.0
        %534 = vmatprep.subr.mxu0 0.0
        %535 = vmatpush1.msra.mxu0 0.0
        %536 = vmatprep.subr.mxu0 0.0
        %537 = vmatpush1.msra.mxu0 0.0
        %538 = vmatprep.subr.mxu0 0.0
        %539 = vmatpush1.msra.mxu0 0.0
        %540 = vmatprep.subr.mxu0 0.0
        %541 = vmatpush1.msra.mxu0 0.0
        %542 = vmatprep.subr.mxu0 0.0
        %543 = vmatpush1.msra.mxu0 0.0
        %544 = vmatprep.subr.mxu0 0.0
        %545 = vmatpush1.msra.mxu0 0.0
        %546 = vmatprep.subr.mxu0 0.0
        %547 = vmatpush1.msra.mxu0 0.0
        %548 = vmatprep.subr.mxu0 0.0
        %549 = vmatpush1.msra.mxu0 0.0
        %550 = vmatprep.subr.mxu0 0.0
        %551 = vmatpush1.msra.mxu0 0.0
        %552 = vmatprep.subr.mxu0 0.0
        %553 = vmatpush1.msra.mxu0 0.0
        %554 = vmatprep.subr.mxu0 0.0
        %555 = vmatpush1.msra.mxu0 0.0
        %556 = vmatprep.subr.mxu0 0.0
        %557 = vmatpush1.msra.mxu0 0.0
        %558 = vmatprep.subr.mxu0 0.0
        %559 = vmatpush1.msra.mxu0 0.0
        %560 = vmatprep.subr.mxu0 0.0
        %561 = vmatpush1.msra.mxu0 0.0
        %562 = vmatprep.subr.mxu0 0.0
        %563 = vmatpush1.msra.mxu0 0.0
        %564 = vmatprep.subr.mxu0 0.0
        %565 = vmatpush1.msra.mxu0 0.0
        %566 = vmatprep.subr.mxu0 0.0
        %567 = vmatpush1.msra.mxu0 0.0
        %568 = vmatprep.subr.mxu0 0.0
        %569 = vmatpush1.msra.mxu0 0.0
        %570 = vmatprep.subr.mxu0 0.0
        %571 = vmatpush1.msra.mxu0 0.0
        %572 = vmatprep.subr.mxu0 0.0
        %573 = vmatpush1.msra.mxu0 0.0
        %574 = vmatprep.subr.mxu0 0.0
        %575 = vmatpush1.msra.mxu0 0.0
        %576 = vmatprep.subr.mxu0 0.0
        %577 = vmatpush1.msra.mxu0 0.0
        %578 = vmatprep.subr.mxu0 0.0
        %579 = vmatpush1.msra.mxu0 0.0
        %580 = vmatprep.subr.mxu0 0.0
        %581 = vmatpush1.msra.mxu0 0.0
        %582 = vmatprep.subr.mxu0 0.0
        %583 = vmatpush1.msra.mxu0 0.0
        %584 = vmatprep.mubr.f32.mxu0 0.0
        %585 = vmatmul.mubr.f32.gmra.mrb[0].mxu0 %v437
        %v586 = vpop.f32.mrb[0].mxu0
        %v587 = vadd.f32 %v518, %v586
        %v588 = vpop.f32.mrb[0].mxu0
        %589 = vdwg.mxu0
        %v590 = vld [vmem:[#allocation11] sm:$0xff]
        %v591 = vld [vmem:[#allocation11 + $0x8] sm:$0xff]
        %v592 = vld [vmem:[#allocation11 + $0x10] sm:$0xff]
        %v593 = vld [vmem:[#allocation11 + $0x18] sm:$0xff]
        %v594 = vld [vmem:[%s7] sm:$0x1]
        %v596 = vlaneseq
        %v597 = vshrl.u32 %v596, 7
        %v598 = vsub.s32 0, %v597
        %v599 = vrot.slane %v594, %v598
        %601 = vmatprep.subr.mxu0 0.0
        %602 = vmatpush1.msra.mxu0 %v590
        %603 = vmatprep.subr.mxu0 0.0
        %604 = vmatpush1.msra.mxu0 %v591
        %605 = vmatprep.subr.mxu0 0.0
        %606 = vmatpush1.msra.mxu0 %v592
        %607 = vmatprep.subr.mxu0 0.0
        %608 = vmatpush1.msra.mxu0 %v593
        %609 = vmatprep.subr.mxu0 0.0
        %610 = vmatpush1.msra.mxu0 0.0
        %611 = vmatprep.subr.mxu0 0.0
        %612 = vmatpush1.msra.mxu0 0.0
        %613 = vmatprep.subr.mxu0 0.0
        %614 = vmatpush1.msra.mxu0 0.0
        %615 = vmatprep.subr.mxu0 0.0
        %616 = vmatpush1.msra.mxu0 0.0
        %617 = vmatprep.subr.mxu0 0.0
        %618 = vmatpush1.msra.mxu0 0.0
        %619 = vmatprep.subr.mxu0 0.0
        %620 = vmatpush1.msra.mxu0 0.0
        %621 = vmatprep.subr.mxu0 0.0
        %622 = vmatpush1.msra.mxu0 0.0
        %623 = vmatprep.subr.mxu0 0.0
        %624 = vmatpush1.msra.mxu0 0.0
        %625 = vmatprep.subr.mxu0 0.0
        %626 = vmatpush1.msra.mxu0 0.0
        %627 = vmatprep.subr.mxu0 0.0
        %628 = vmatpush1.msra.mxu0 0.0
        %629 = vmatprep.subr.mxu0 0.0
        %630 = vmatpush1.msra.mxu0 0.0
        %631 = vmatprep.subr.mxu0 0.0
        %632 = vmatpush1.msra.mxu0 0.0
        %633 = vmatprep.subr.mxu0 0.0
        %634 = vmatpush1.msra.mxu0 0.0
        %635 = vmatprep.subr.mxu0 0.0
        %636 = vmatpush1.msra.mxu0 0.0
        %637 = vmatprep.subr.mxu0 0.0
        %638 = vmatpush1.msra.mxu0 0.0
        %639 = vmatprep.subr.mxu0 0.0
        %640 = vmatpush1.msra.mxu0 0.0
        %641 = vmatprep.subr.mxu0 0.0
        %642 = vmatpush1.msra.mxu0 0.0
        %643 = vmatprep.subr.mxu0 0.0
        %644 = vmatpush1.msra.mxu0 0.0
        %645 = vmatprep.subr.mxu0 0.0
        %646 = vmatpush1.msra.mxu0 0.0
        %647 = vmatprep.subr.mxu0 0.0
        %648 = vmatpush1.msra.mxu0 0.0
        %649 = vmatprep.subr.mxu0 0.0
        %650 = vmatpush1.msra.mxu0 0.0
        %651 = vmatprep.subr.mxu0 0.0
        %652 = vmatpush1.msra.mxu0 0.0
        %653 = vmatprep.subr.mxu0 0.0
        %654 = vmatpush1.msra.mxu0 0.0
        %655 = vmatprep.subr.mxu0 0.0
        %656 = vmatpush1.msra.mxu0 0.0
        %657 = vmatprep.subr.mxu0 0.0
        %658 = vmatpush1.msra.mxu0 0.0
        %659 = vmatprep.subr.mxu0 0.0
        %660 = vmatpush1.msra.mxu0 0.0
        %661 = vmatprep.subr.mxu0 0.0
        %662 = vmatpush1.msra.mxu0 0.0
        %663 = vmatprep.subr.mxu0 0.0
        %664 = vmatpush1.msra.mxu0 0.0
        %665 = vmatprep.mubr.f32.mxu0 0.0
        %666 = vmatmul.mubr.f32.gmra.mrb[0].mxu0 %v437
        %v667 = vpop.f32.mrb[0].mxu0
        %v668 = vadd.f32 %v599, %v667
        %v669 = vpop.f32.mrb[0].mxu0
        %670 = vdwg.mxu0
        %v671 = vlaneseq
        %v672 = vshrl.u32 %v671, 7
        %v673 = vlaneseq
        %v674 = vand.u32 %v673, 127
        %v675 = vsub.s32 %v674, %v672
        %676 = vxpose.xlu0.b32.start [1/16] %v587, 128
        %677 = vxpose.xlu0.b32.cont [2/16] 0.0, 128
        %678 = vxpose.xlu0.b32.cont [3/16] 0.0, 128
        %679 = vxpose.xlu0.b32.cont [4/16] 0.0, 128
        %680 = vxpose.xlu0.b32.cont [5/16] 0.0, 128
        %681 = vxpose.xlu0.b32.cont [6/16] 0.0, 128
        %682 = vxpose.xlu0.b32.cont [7/16] 0.0, 128
        %683 = vxpose.xlu0.b32.cont [8/16] 0.0, 128
        %684 = vxpose.xlu0.b32.cont [9/16] 0.0, 128
        %685 = vxpose.xlu0.b32.cont [10/16] 0.0, 128
        %686 = vxpose.xlu0.b32.cont [11/16] 0.0, 128
        %687 = vxpose.xlu0.b32.cont [12/16] 0.0, 128
        %688 = vxpose.xlu0.b32.cont [13/16] 0.0, 128
        %689 = vxpose.xlu0.b32.cont [14/16] 0.0, 128
        %690 = vxpose.xlu0.b32.cont [15/16] 0.0, 128
        %691 = vxpose.xlu0.b32.end [16/16] 0.0, 128
        %v692 = vpop.trf.xlu0
        %v693 = vpop.trf.xlu0
        %v694 = vpop.trf.xlu0
        %v695 = vpop.trf.xlu0
        %v696 = vpop.trf.xlu0
        %v697 = vpop.trf.xlu0
        %v698 = vpop.trf.xlu0
        %v699 = vpop.trf.xlu0
        %v700 = vpop.trf.xlu0
        %v701 = vpop.trf.xlu0
        %v702 = vpop.trf.xlu0
        %v703 = vpop.trf.xlu0
        %v704 = vpop.trf.xlu0
        %v705 = vpop.trf.xlu0
        %v706 = vpop.trf.xlu0
        %v707 = vpop.trf.xlu0
        %s708 = smul.u32 %s33, 8
        %s709 = scalar_lea.vmem [#allocation2], %s708
        %vm710 = vcmask 64512
        %711 = vst.msk [vmem:[%s709] sm:$0xff] %vm710, %v692
        %s712 = scalar_lea.vmem [#allocation3], %s708
        %713 = vst.msk [vmem:[%s712] sm:$0xff] %vm710, %v668
        %s714 = sadd.s32 %s33, 1
        // While loop
        $region77: #{tpu_custom_call.1} parent=55 // loop_pre_header
          _
        $region78: #{tpu_custom_call.1} parent=55 // loop_header
          %s716 = sphi 0, %s718
          %p717 = scmp.ge.s32.totalorder %s716, %s714
          %v721 = vphi -inf, %v810
          %v722 = vphi 0.0, %v821
          %v723 = vphi 0.0, %v896
        $region79: #{tpu_custom_call.1} parent=55 // loop_header_branch
          %720 = sbr.rel (%p717) target = $region83
        $region80: #{tpu_custom_call.1} parent=55 // loop_body
          %s724 = smul.u32 %s716, 8
          %s725 = scalar_lea.vmem [#allocation2], %s724
          %v726 = vld [vmem:[%s725] sm:$0xff]
          %s727 = scalar_lea.vmem [#allocation3], %s724
          %v728 = vld [vmem:[%s727] sm:$0xff]
          %v730 = vsel %vm710, %v506, 0
          %732 = vmatprep.subr.mxu0 0.0
          %733 = vmatpush1.msra.mxu0 %v726
          %734 = vmatprep.subr.mxu0 0.0
          %735 = vmatpush1.msra.mxu0 0.0
          %736 = vmatprep.subr.mxu0 0.0
          %737 = vmatpush1.msra.mxu0 0.0
          %738 = vmatprep.subr.mxu0 0.0
          %739 = vmatpush1.msra.mxu0 0.0
          %740 = vmatprep.subr.mxu0 0.0
          %741 = vmatpush1.msra.mxu0 0.0
          %742 = vmatprep.subr.mxu0 0.0
          %743 = vmatpush1.msra.mxu0 0.0
          %744 = vmatprep.subr.mxu0 0.0
          %745 = vmatpush1.msra.mxu0 0.0
          %746 = vmatprep.subr.mxu0 0.0
          %747 = vmatpush1.msra.mxu0 0.0
          %748 = vmatprep.subr.mxu0 0.0
          %749 = vmatpush1.msra.mxu0 0.0
          %750 = vmatprep.subr.mxu0 0.0
          %751 = vmatpush1.msra.mxu0 0.0
          %752 = vmatprep.subr.mxu0 0.0
          %753 = vmatpush1.msra.mxu0 0.0
          %754 = vmatprep.subr.mxu0 0.0
          %755 = vmatpush1.msra.mxu0 0.0
          %756 = vmatprep.subr.mxu0 0.0
          %757 = vmatpush1.msra.mxu0 0.0
          %758 = vmatprep.subr.mxu0 0.0
          %759 = vmatpush1.msra.mxu0 0.0
          %760 = vmatprep.subr.mxu0 0.0
          %761 = vmatpush1.msra.mxu0 0.0
          %762 = vmatprep.subr.mxu0 0.0
          %763 = vmatpush1.msra.mxu0 0.0
          %764 = vmatprep.subr.mxu0 0.0
          %765 = vmatpush1.msra.mxu0 0.0
          %766 = vmatprep.subr.mxu0 0.0
          %767 = vmatpush1.msra.mxu0 0.0
          %768 = vmatprep.subr.mxu0 0.0
          %769 = vmatpush1.msra.mxu0 0.0
          %770 = vmatprep.subr.mxu0 0.0
          %771 = vmatpush1.msra.mxu0 0.0
          %772 = vmatprep.subr.mxu0 0.0
          %773 = vmatpush1.msra.mxu0 0.0
          %774 = vmatprep.subr.mxu0 0.0
          %775 = vmatpush1.msra.mxu0 0.0
          %776 = vmatprep.subr.mxu0 0.0
          %777 = vmatpush1.msra.mxu0 0.0
          %778 = vmatprep.subr.mxu0 0.0
          %779 = vmatpush1.msra.mxu0 0.0
          %780 = vmatprep.subr.mxu0 0.0
          %781 = vmatpush1.msra.mxu0 0.0
          %782 = vmatprep.subr.mxu0 0.0
          %783 = vmatpush1.msra.mxu0 0.0
          %784 = vmatprep.subr.mxu0 0.0
          %785 = vmatpush1.msra.mxu0 0.0
          %786 = vmatprep.subr.mxu0 0.0
          %787 = vmatpush1.msra.mxu0 0.0
          %788 = vmatprep.subr.mxu0 0.0
          %789 = vmatpush1.msra.mxu0 0.0
          %790 = vmatprep.subr.mxu0 0.0
          %791 = vmatpush1.msra.mxu0 0.0
          %792 = vmatprep.subr.mxu0 0.0
          %793 = vmatpush1.msra.mxu0 0.0
          %794 = vmatprep.subr.mxu0 0.0
          %795 = vmatpush1.msra.mxu0 0.0
          %796 = vmatprep.mubr.f32.mxu0 0.0
          %797 = vmatmul.mubr.f32.gmra.mrb[0].mxu0 %v730
          %v798 = vpop.f32.mrb[0].mxu0
          %v799 = vadd.f32 0.0, %v798
          %v800 = vpop.f32.mrb[0].mxu0
          %801 = vdwg.mxu0
          %s802 = ssub.s32 %s33, %s716
          %s803 = smul.u32 %s802, 8
          %v804 = vstv %s803
          %vm805 = vcmp.gt.s32.totalorder %v675, %v804
          %v806 = vsel %vm805, -100000.0, %v799
          %v807 = vsel %vm710, %v806, -inf
          %808 = vmax.xlane.f32.xlu0 %v807
          %v809 = vpop.xlane.xlu0 %808
          %v810 = vmax.f32 %v721, %v809
          %v811 = vsub.f32 %v721, %v810
          %v812 = vmul.f32 %v811, 1.442695
          %v813 = vpow.pop %v812
          %v814 = vsub.f32 %v806, %v810
          %v815 = vmul.f32 %v814, 1.442695
          %v816 = vpow.pop %v815
          %v817 = vmul.f32 %v813, %v722
          %v818 = vsel %vm710, %v816, 0.0
          %819 = vadd.xlane.f32.xlu0 %v818
          %v820 = vpop.xlane.xlu0 %819
          %v821 = vadd.f32 %v817, %v820
          %v822 = vmul.f32 %v813, %v723
          %v824 = vsel %vm710, %v816, 0
          %826 = vmatprep.subr.mxu0 0.0
          %827 = vmatpush1.msra.mxu0 %v728
          %828 = vmatprep.subr.mxu0 0.0
          %829 = vmatpush1.msra.mxu0 0.0
          %830 = vmatprep.subr.mxu0 0.0
          %831 = vmatpush1.msra.mxu0 0.0
          %832 = vmatprep.subr.mxu0 0.0
          %833 = vmatpush1.msra.mxu0 0.0
          %834 = vmatprep.subr.mxu0 0.0
          %835 = vmatpush1.msra.mxu0 0.0
          %836 = vmatprep.subr.mxu0 0.0
          %837 = vmatpush1.msra.mxu0 0.0
          %838 = vmatprep.subr.mxu0 0.0
          %839 = vmatpush1.msra.mxu0 0.0
          %840 = vmatprep.subr.mxu0 0.0
          %841 = vmatpush1.msra.mxu0 0.0
          %842 = vmatprep.subr.mxu0 0.0
          %843 = vmatpush1.msra.mxu0 0.0
          %844 = vmatprep.subr.mxu0 0.0
          %845 = vmatpush1.msra.mxu0 0.0
          %846 = vmatprep.subr.mxu0 0.0
          %847 = vmatpush1.msra.mxu0 0.0
          %848 = vmatprep.subr.mxu0 0.0
          %849 = vmatpush1.msra.mxu0 0.0
          %850 = vmatprep.subr.mxu0 0.0
          %851 = vmatpush1.msra.mxu0 0.0
          %852 = vmatprep.subr.mxu0 0.0
          %853 = vmatpush1.msra.mxu0 0.0
          %854 = vmatprep.subr.mxu0 0.0
          %855 = vmatpush1.msra.mxu0 0.0
          %856 = vmatprep.subr.mxu0 0.0
          %857 = vmatpush1.msra.mxu0 0.0
          %858 = vmatprep.subr.mxu0 0.0
          %859 = vmatpush1.msra.mxu0 0.0
          %860 = vmatprep.subr.mxu0 0.0
          %861 = vmatpush1.msra.mxu0 0.0
          %862 = vmatprep.subr.mxu0 0.0
          %863 = vmatpush1.msra.mxu0 0.0
          %864 = vmatprep.subr.mxu0 0.0
          %865 = vmatpush1.msra.mxu0 0.0
          %866 = vmatprep.subr.mxu0 0.0
          %867 = vmatpush1.msra.mxu0 0.0
          %868 = vmatprep.subr.mxu0 0.0
          %869 = vmatpush1.msra.mxu0 0.0
          %870 = vmatprep.subr.mxu0 0.0
          %871 = vmatpush1.msra.mxu0 0.0
          %872 = vmatprep.subr.mxu0 0.0
          %873 = vmatpush1.msra.mxu0 0.0
          %874 = vmatprep.subr.mxu0 0.0
          %875 = vmatpush1.msra.mxu0 0.0
          %876 = vmatprep.subr.mxu0 0.0
          %877 = vmatpush1.msra.mxu0 0.0
          %878 = vmatprep.subr.mxu0 0.0
          %879 = vmatpush1.msra.mxu0 0.0
          %880 = vmatprep.subr.mxu0 0.0
          %881 = vmatpush1.msra.mxu0 0.0
          %882 = vmatprep.subr.mxu0 0.0
          %883 = vmatpush1.msra.mxu0 0.0
          %884 = vmatprep.subr.mxu0 0.0
          %885 = vmatpush1.msra.mxu0 0.0
          %886 = vmatprep.subr.mxu0 0.0
          %887 = vmatpush1.msra.mxu0 0.0
          %888 = vmatprep.subr.mxu0 0.0
          %889 = vmatpush1.msra.mxu0 0.0
          %890 = vmatprep.mubr.f32.mxu0 0.0
          %891 = vmatmul.mubr.f32.gmra.mrb[0].mxu0 %v824
          %v892 = vpop.f32.mrb[0].mxu0
          %v893 = vadd.f32 0.0, %v892
          %v894 = vpop.f32.mrb[0].mxu0
          %895 = vdwg.mxu0
          %v896 = vadd.f32 %v822, %v893
        $region81: #{tpu_custom_call.1} parent=55 // loop_footer
          %s718 = sadd.s32 %s716, 1
        $region82: #{tpu_custom_call.1} parent=55 // loop_footer_branch
          %715 = sbr.rel target = $region78
        $region83: #{tpu_custom_call.1} parent=55 // loop_exit
          _
        %v897 = vrcp.pop %v722
        %v898 = vmul.f32 1.0, %v897
        %v899 = vmul.f32 %v723, %v898
        %900 = vst.msk [vmem:[#allocation4] sm:$0xff] %vm710, %v899
        %902 = vrot.lane.b32.xlu0 %v587, 120
        %v903 = vpop.permute.xlu0 %902
        %905 = vxpose.xlu0.b32.start [1/16] %v903, 128
        %906 = vxpose.xlu0.b32.cont [2/16] 0.0, 128
        %907 = vxpose.xlu0.b32.cont [3/16] 0.0, 128
        %908 = vxpose.xlu0.b32.cont [4/16] 0.0, 128
        %909 = vxpose.xlu0.b32.cont [5/16] 0.0, 128
        %910 = vxpose.xlu0.b32.cont [6/16] 0.0, 128
        %911 = vxpose.xlu0.b32.cont [7/16] 0.0, 128
        %912 = vxpose.xlu0.b32.cont [8/16] 0.0, 128
        %913 = vxpose.xlu0.b32.cont [9/16] 0.0, 128
        %914 = vxpose.xlu0.b32.cont [10/16] 0.0, 128
        %915 = vxpose.xlu0.b32.cont [11/16] 0.0, 128
        %916 = vxpose.xlu0.b32.cont [12/16] 0.0, 128
        %917 = vxpose.xlu0.b32.cont [13/16] 0.0, 128
        %918 = vxpose.xlu0.b32.cont [14/16] 0.0, 128
        %919 = vxpose.xlu0.b32.cont [15/16] 0.0, 128
        %920 = vxpose.xlu0.b32.end [16/16] 0.0, 128
        %v921 = vpop.trf.xlu0
        %v922 = vpop.trf.xlu0
        %v923 = vpop.trf.xlu0
        %v924 = vpop.trf.xlu0
        %v925 = vpop.trf.xlu0
        %v926 = vpop.trf.xlu0
        %v927 = vpop.trf.xlu0
        %v928 = vpop.trf.xlu0
        %v929 = vpop.trf.xlu0
        %v930 = vpop.trf.xlu0
        %v931 = vpop.trf.xlu0
        %v932 = vpop.trf.xlu0
        %v933 = vpop.trf.xlu0
        %v934 = vpop.trf.xlu0
        %v935 = vpop.trf.xlu0
        %v936 = vpop.trf.xlu0
        %s937 = sadd.s32 %s708, 8
        %s938 = scalar_lea.vmem [#allocation2], %s937
        %939 = vst.msk [vmem:[%s938] sm:$0xff] %vm710, %v921
        %941 = vrot.lane.b32.xlu0 %v668, 120
        %v942 = vpop.permute.xlu0 %941
        %s944 = scalar_lea.vmem [#allocation3], %s937
        %945 = vst.msk [vmem:[%s944] sm:$0xff] %vm710, %v942
        // While loop
        $region84: #{tpu_custom_call.1} parent=55 // loop_pre_header
          _
        $region85: #{tpu_custom_call.1} parent=55 // loop_header
          %s947 = sphi 0, %s949
          %p948 = scmp.ge.s32.totalorder %s947, %s714
          %v952 = vphi -inf, %v1044
          %v953 = vphi 0.0, %v1055
          %v954 = vphi 0.0, %v1130
        $region86: #{tpu_custom_call.1} parent=55 // loop_header_branch
          %951 = sbr.rel (%p948) target = $region90
        $region87: #{tpu_custom_call.1} parent=55 // loop_body
          %s955 = smul.u32 %s947, 8
          %s956 = sadd.s32 %s955, 8
          %s957 = scalar_lea.vmem [#allocation2], %s956
          %v958 = vld [vmem:[%s957] sm:$0xff]
          %s959 = scalar_lea.vmem [#allocation3], %s956
          %v960 = vld [vmem:[%s959] sm:$0xff]
          %962 = vrot.lane.b32.xlu0 %v506, 120
          %v963 = vpop.permute.xlu0 %962
          %v964 = vsel %vm710, %v963, 0
          %966 = vmatprep.subr.mxu0 0.0
          %967 = vmatpush1.msra.mxu0 %v958
          %968 = vmatprep.subr.mxu0 0.0
          %969 = vmatpush1.msra.mxu0 0.0
          %970 = vmatprep.subr.mxu0 0.0
          %971 = vmatpush1.msra.mxu0 0.0
          %972 = vmatprep.subr.mxu0 0.0
          %973 = vmatpush1.msra.mxu0 0.0
          %974 = vmatprep.subr.mxu0 0.0
          %975 = vmatpush1.msra.mxu0 0.0
          %976 = vmatprep.subr.mxu0 0.0
          %977 = vmatpush1.msra.mxu0 0.0
          %978 = vmatprep.subr.mxu0 0.0
          %979 = vmatpush1.msra.mxu0 0.0
          %980 = vmatprep.subr.mxu0 0.0
          %981 = vmatpush1.msra.mxu0 0.0
          %982 = vmatprep.subr.mxu0 0.0
          %983 = vmatpush1.msra.mxu0 0.0
          %984 = vmatprep.subr.mxu0 0.0
          %985 = vmatpush1.msra.mxu0 0.0
          %986 = vmatprep.subr.mxu0 0.0
          %987 = vmatpush1.msra.mxu0 0.0
          %988 = vmatprep.subr.mxu0 0.0
          %989 = vmatpush1.msra.mxu0 0.0
          %990 = vmatprep.subr.mxu0 0.0
          %991 = vmatpush1.msra.mxu0 0.0
          %992 = vmatprep.subr.mxu0 0.0
          %993 = vmatpush1.msra.mxu0 0.0
          %994 = vmatprep.subr.mxu0 0.0
          %995 = vmatpush1.msra.mxu0 0.0
          %996 = vmatprep.subr.mxu0 0.0
          %997 = vmatpush1.msra.mxu0 0.0
          %998 = vmatprep.subr.mxu0 0.0
          %999 = vmatpush1.msra.mxu0 0.0
          %1000 = vmatprep.subr.mxu0 0.0
          %1001 = vmatpush1.msra.mxu0 0.0
          %1002 = vmatprep.subr.mxu0 0.0
          %1003 = vmatpush1.msra.mxu0 0.0
          %1004 = vmatprep.subr.mxu0 0.0
          %1005 = vmatpush1.msra.mxu0 0.0
          %1006 = vmatprep.subr.mxu0 0.0
          %1007 = vmatpush1.msra.mxu0 0.0
          %1008 = vmatprep.subr.mxu0 0.0
          %1009 = vmatpush1.msra.mxu0 0.0
          %1010 = vmatprep.subr.mxu0 0.0
          %1011 = vmatpush1.msra.mxu0 0.0
          %1012 = vmatprep.subr.mxu0 0.0
          %1013 = vmatpush1.msra.mxu0 0.0
          %1014 = vmatprep.subr.mxu0 0.0
          %1015 = vmatpush1.msra.mxu0 0.0
          %1016 = vmatprep.subr.mxu0 0.0
          %1017 = vmatpush1.msra.mxu0 0.0
          %1018 = vmatprep.subr.mxu0 0.0
          %1019 = vmatpush1.msra.mxu0 0.0
          %1020 = vmatprep.subr.mxu0 0.0
          %1021 = vmatpush1.msra.mxu0 0.0
          %1022 = vmatprep.subr.mxu0 0.0
          %1023 = vmatpush1.msra.mxu0 0.0
          %1024 = vmatprep.subr.mxu0 0.0
          %1025 = vmatpush1.msra.mxu0 0.0
          %1026 = vmatprep.subr.mxu0 0.0
          %1027 = vmatpush1.msra.mxu0 0.0
          %1028 = vmatprep.subr.mxu0 0.0
          %1029 = vmatpush1.msra.mxu0 0.0
          %1030 = vmatprep.mubr.f32.mxu0 0.0
          %1031 = vmatmul.mubr.f32.gmra.mrb[0].mxu0 %v964
          %v1032 = vpop.f32.mrb[0].mxu0
          %v1033 = vadd.f32 0.0, %v1032
          %v1034 = vpop.f32.mrb[0].mxu0
          %1035 = vdwg.mxu0
          %s1036 = ssub.s32 %s33, %s947
          %s1037 = smul.u32 %s1036, 8
          %v1038 = vstv %s1037
          %vm1039 = vcmp.gt.s32.totalorder %v675, %v1038
          %v1040 = vsel %vm1039, -100000.0, %v1033
          %v1041 = vsel %vm710, %v1040, -inf
          %1042 = vmax.xlane.f32.xlu0 %v1041
          %v1043 = vpop.xlane.xlu0 %1042
          %v1044 = vmax.f32 %v952, %v1043
          %v1045 = vsub.f32 %v952, %v1044
          %v1046 = vmul.f32 %v1045, 1.442695
          %v1047 = vpow.pop %v1046
          %v1048 = vsub.f32 %v1040, %v1044
          %v1049 = vmul.f32 %v1048, 1.442695
          %v1050 = vpow.pop %v1049
          %v1051 = vmul.f32 %v1047, %v953
          %v1052 = vsel %vm710, %v1050, 0.0
          %1053 = vadd.xlane.f32.xlu0 %v1052
          %v1054 = vpop.xlane.xlu0 %1053
          %v1055 = vadd.f32 %v1051, %v1054
          %v1056 = vmul.f32 %v1047, %v954
          %v1058 = vsel %vm710, %v1050, 0
          %1060 = vmatprep.subr.mxu0 0.0
          %1061 = vmatpush1.msra.mxu0 %v960
          %1062 = vmatprep.subr.mxu0 0.0
          %1063 = vmatpush1.msra.mxu0 0.0
          %1064 = vmatprep.subr.mxu0 0.0
          %1065 = vmatpush1.msra.mxu0 0.0
          %1066 = vmatprep.subr.mxu0 0.0
          %1067 = vmatpush1.msra.mxu0 0.0
          %1068 = vmatprep.subr.mxu0 0.0
          %1069 = vmatpush1.msra.mxu0 0.0
          %1070 = vmatprep.subr.mxu0 0.0
          %1071 = vmatpush1.msra.mxu0 0.0
          %1072 = vmatprep.subr.mxu0 0.0
          %1073 = vmatpush1.msra.mxu0 0.0
          %1074 = vmatprep.subr.mxu0 0.0
          %1075 = vmatpush1.msra.mxu0 0.0
          %1076 = vmatprep.subr.mxu0 0.0
          %1077 = vmatpush1.msra.mxu0 0.0
          %1078 = vmatprep.subr.mxu0 0.0
          %1079 = vmatpush1.msra.mxu0 0.0
          %1080 = vmatprep.subr.mxu0 0.0
          %1081 = vmatpush1.msra.mxu0 0.0
          %1082 = vmatprep.subr.mxu0 0.0
          %1083 = vmatpush1.msra.mxu0 0.0
          %1084 = vmatprep.subr.mxu0 0.0
          %1085 = vmatpush1.msra.mxu0 0.0
          %1086 = vmatprep.subr.mxu0 0.0
          %1087 = vmatpush1.msra.mxu0 0.0
          %1088 = vmatprep.subr.mxu0 0.0
          %1089 = vmatpush1.msra.mxu0 0.0
          %1090 = vmatprep.subr.mxu0 0.0
          %1091 = vmatpush1.msra.mxu0 0.0
          %1092 = vmatprep.subr.mxu0 0.0
          %1093 = vmatpush1.msra.mxu0 0.0
          %1094 = vmatprep.subr.mxu0 0.0
          %1095 = vmatpush1.msra.mxu0 0.0
          %1096 = vmatprep.subr.mxu0 0.0
          %1097 = vmatpush1.msra.mxu0 0.0
          %1098 = vmatprep.subr.mxu0 0.0
          %1099 = vmatpush1.msra.mxu0 0.0
          %1100 = vmatprep.subr.mxu0 0.0
          %1101 = vmatpush1.msra.mxu0 0.0
          %1102 = vmatprep.subr.mxu0 0.0
          %1103 = vmatpush1.msra.mxu0 0.0
          %1104 = vmatprep.subr.mxu0 0.0
          %1105 = vmatpush1.msra.mxu0 0.0
          %1106 = vmatprep.subr.mxu0 0.0
          %1107 = vmatpush1.msra.mxu0 0.0
          %1108 = vmatprep.subr.mxu0 0.0
          %1109 = vmatpush1.msra.mxu0 0.0
          %1110 = vmatprep.subr.mxu0 0.0
          %1111 = vmatpush1.msra.mxu0 0.0
          %1112 = vmatprep.subr.mxu0 0.0
          %1113 = vmatpush1.msra.mxu0 0.0
          %1114 = vmatprep.subr.mxu0 0.0
          %1115 = vmatpush1.msra.mxu0 0.0
          %1116 = vmatprep.subr.mxu0 0.0
          %1117 = vmatpush1.msra.mxu0 0.0
          %1118 = vmatprep.subr.mxu0 0.0
          %1119 = vmatpush1.msra.mxu0 0.0
          %1120 = vmatprep.subr.mxu0 0.0
          %1121 = vmatpush1.msra.mxu0 0.0
          %1122 = vmatprep.subr.mxu0 0.0
          %1123 = vmatpush1.msra.mxu0 0.0
          %1124 = vmatprep.mubr.f32.mxu0 0.0
          %1125 = vmatmul.mubr.f32.gmra.mrb[0].mxu0 %v1058
          %v1126 = vpop.f32.mrb[0].mxu0
          %v1127 = vadd.f32 0.0, %v1126
          %v1128 = vpop.f32.mrb[0].mxu0
          %1129 = vdwg.mxu0
          %v1130 = vadd.f32 %v1056, %v1127
        $region88: #{tpu_custom_call.1} parent=55 // loop_footer
          %s949 = sadd.s32 %s947, 1
        $region89: #{tpu_custom_call.1} parent=55 // loop_footer_branch
          %946 = sbr.rel target = $region85
        $region90: #{tpu_custom_call.1} parent=55 // loop_exit
          _
        %v1131 = vrcp.pop %v953
        %v1132 = vmul.f32 1.0, %v1131
        %v1133 = vmul.f32 %v954, %v1132
        %1135 = vrot.lane.b32.xlu0 %v1133, 8
        %v1136 = vpop.permute.xlu0 %1135
        %vm1138 = vcmask 130112
        %1139 = vst.msk [vmem:[#allocation4] sm:$0xff] %vm1138, %v1136
        %1140 = vrot.lane.b32.xlu0 %v587, 112
        %v1141 = vpop.permute.xlu0 %1140
        %1143 = vxpose.xlu0.b32.start [1/16] %v1141, 128
        %1144 = vxpose.xlu0.b32.cont [2/16] 0.0, 128
        %1145 = vxpose.xlu0.b32.cont [3/16] 0.0, 128
        %1146 = vxpose.xlu0.b32.cont [4/16] 0.0, 128
        %1147 = vxpose.xlu0.b32.cont [5/16] 0.0, 128
        %1148 = vxpose.xlu0.b32.cont [6/16] 0.0, 128
        %1149 = vxpose.xlu0.b32.cont [7/16] 0.0, 128
        %1150 = vxpose.xlu0.b32.cont [8/16] 0.0, 128
        %1151 = vxpose.xlu0.b32.cont [9/16] 0.0, 128
        %1152 = vxpose.xlu0.b32.cont [10/16] 0.0, 128
        %1153 = vxpose.xlu0.b32.cont [11/16] 0.0, 128
        %1154 = vxpose.xlu0.b32.cont [12/16] 0.0, 128
        %1155 = vxpose.xlu0.b32.cont [13/16] 0.0, 128
        %1156 = vxpose.xlu0.b32.cont [14/16] 0.0, 128
        %1157 = vxpose.xlu0.b32.cont [15/16] 0.0, 128
        %1158 = vxpose.xlu0.b32.end [16/16] 0.0, 128
        %v1159 = vpop.trf.xlu0
        %v1160 = vpop.trf.xlu0
        %v1161 = vpop.trf.xlu0
        %v1162 = vpop.trf.xlu0
        %v1163 = vpop.trf.xlu0
        %v1164 = vpop.trf.xlu0
        %v1165 = vpop.trf.xlu0
        %v1166 = vpop.trf.xlu0
        %v1167 = vpop.trf.xlu0
        %v1168 = vpop.trf.xlu0
        %v1169 = vpop.trf.xlu0
        %v1170 = vpop.trf.xlu0
        %v1171 = vpop.trf.xlu0
        %v1172 = vpop.trf.xlu0
        %v1173 = vpop.trf.xlu0
        %v1174 = vpop.trf.xlu0
        %s1175 = sadd.s32 %s708, 16
        %s1176 = scalar_lea.vmem [#allocation2], %s1175
        %1177 = vst.msk [vmem:[%s1176] sm:$0xff] %vm710, %v1159
        %1178 = vrot.lane.b32.xlu0 %v668, 112
        %v1179 = vpop.permute.xlu0 %1178
        %s1181 = scalar_lea.vmem [#allocation3], %s1175
        %1182 = vst.msk [vmem:[%s1181] sm:$0xff] %vm710, %v1179
        // While loop
        $region91: #{tpu_custom_call.1} parent=55 // loop_pre_header
          _
        $region92: #{tpu_custom_call.1} parent=55 // loop_header
          %s1184 = sphi 0, %s1186
          %p1185 = scmp.ge.s32.totalorder %s1184, %s714
          %v1189 = vphi -inf, %v1281
          %v1190 = vphi 0.0, %v1292
          %v1191 = vphi 0.0, %v1367
        $region93: #{tpu_custom_call.1} parent=55 // loop_header_branch
          %1188 = sbr.rel (%p1185) target = $region97
        $region94: #{tpu_custom_call.1} parent=55 // loop_body
          %s1192 = smul.u32 %s1184, 8
          %s1193 = sadd.s32 %s1192, 16
          %s1194 = scalar_lea.vmem [#allocation2], %s1193
          %v1195 = vld [vmem:[%s1194] sm:$0xff]
          %s1196 = scalar_lea.vmem [#allocation3], %s1193
          %v1197 = vld [vmem:[%s1196] sm:$0xff]
          %1199 = vrot.lane.b32.xlu0 %v506, 112
          %v1200 = vpop.permute.xlu0 %1199
          %v1201 = vsel %vm710, %v1200, 0
          %1203 = vmatprep.subr.mxu0 0.0
          %1204 = vmatpush1.msra.mxu0 %v1195
          %1205 = vmatprep.subr.mxu0 0.0
          %1206 = vmatpush1.msra.mxu0 0.0
          %1207 = vmatprep.subr.mxu0 0.0
          %1208 = vmatpush1.msra.mxu0 0.0
          %1209 = vmatprep.subr.mxu0 0.0
          %1210 = vmatpush1.msra.mxu0 0.0
          %1211 = vmatprep.subr.mxu0 0.0
          %1212 = vmatpush1.msra.mxu0 0.0
          %1213 = vmatprep.subr.mxu0 0.0
          %1214 = vmatpush1.msra.mxu0 0.0
          %1215 = vmatprep.subr.mxu0 0.0
          %1216 = vmatpush1.msra.mxu0 0.0
          %1217 = vmatprep.subr.mxu0 0.0
          %1218 = vmatpush1.msra.mxu0 0.0
          %1219 = vmatprep.subr.mxu0 0.0
          %1220 = vmatpush1.msra.mxu0 0.0
          %1221 = vmatprep.subr.mxu0 0.0
          %1222 = vmatpush1.msra.mxu0 0.0
          %1223 = vmatprep.subr.mxu0 0.0
          %1224 = vmatpush1.msra.mxu0 0.0
          %1225 = vmatprep.subr.mxu0 0.0
          %1226 = vmatpush1.msra.mxu0 0.0
          %1227 = vmatprep.subr.mxu0 0.0
          %1228 = vmatpush1.msra.mxu0 0.0
          %1229 = vmatprep.subr.mxu0 0.0
          %1230 = vmatpush1.msra.mxu0 0.0
          %1231 = vmatprep.subr.mxu0 0.0
          %1232 = vmatpush1.msra.mxu0 0.0
          %1233 = vmatprep.subr.mxu0 0.0
          %1234 = vmatpush1.msra.mxu0 0.0
          %1235 = vmatprep.subr.mxu0 0.0
          %1236 = vmatpush1.msra.mxu0 0.0
          %1237 = vmatprep.subr.mxu0 0.0
          %1238 = vmatpush1.msra.mxu0 0.0
          %1239 = vmatprep.subr.mxu0 0.0
          %1240 = vmatpush1.msra.mxu0 0.0
          %1241 = vmatprep.subr.mxu0 0.0
          %1242 = vmatpush1.msra.mxu0 0.0
          %1243 = vmatprep.subr.mxu0 0.0
          %1244 = vmatpush1.msra.mxu0 0.0
          %1245 = vmatprep.subr.mxu0 0.0
          %1246 = vmatpush1.msra.mxu0 0.0
          %1247 = vmatprep.subr.mxu0 0.0
          %1248 = vmatpush1.msra.mxu0 0.0
          %1249 = vmatprep.subr.mxu0 0.0
          %1250 = vmatpush1.msra.mxu0 0.0
          %1251 = vmatprep.subr.mxu0 0.0
          %1252 = vmatpush1.msra.mxu0 0.0
          %1253 = vmatprep.subr.mxu0 0.0
          %1254 = vmatpush1.msra.mxu0 0.0
          %1255 = vmatprep.subr.mxu0 0.0
          %1256 = vmatpush1.msra.mxu0 0.0
          %1257 = vmatprep.subr.mxu0 0.0
          %1258 = vmatpush1.msra.mxu0 0.0
          %1259 = vmatprep.subr.mxu0 0.0
          %1260 = vmatpush1.msra.mxu0 0.0
          %1261 = vmatprep.subr.mxu0 0.0
          %1262 = vmatpush1.msra.mxu0 0.0
          %1263 = vmatprep.subr.mxu0 0.0
          %1264 = vmatpush1.msra.mxu0 0.0
          %1265 = vmatprep.subr.mxu0 0.0
          %1266 = vmatpush1.msra.mxu0 0.0
          %1267 = vmatprep.mubr.f32.mxu0 0.0
          %1268 = vmatmul.mubr.f32.gmra.mrb[0].mxu0 %v1201
          %v1269 = vpop.f32.mrb[0].mxu0
          %v1270 = vadd.f32 0.0, %v1269
          %v1271 = vpop.f32.mrb[0].mxu0
          %1272 = vdwg.mxu0
          %s1273 = ssub.s32 %s33, %s1184
          %s1274 = smul.u32 %s1273, 8
          %v1275 = vstv %s1274
          %vm1276 = vcmp.gt.s32.totalorder %v675, %v1275
          %v1277 = vsel %vm1276, -100000.0, %v1270
          %v1278 = vsel %vm710, %v1277, -inf
          %1279 = vmax.xlane.f32.xlu0 %v1278
          %v1280 = vpop.xlane.xlu0 %1279
          %v1281 = vmax.f32 %v1189, %v1280
          %v1282 = vsub.f32 %v1189, %v1281
          %v1283 = vmul.f32 %v1282, 1.442695
          %v1284 = vpow.pop %v1283
          %v1285 = vsub.f32 %v1277, %v1281
          %v1286 = vmul.f32 %v1285, 1.442695
          %v1287 = vpow.pop %v1286
          %v1288 = vmul.f32 %v1284, %v1190
          %v1289 = vsel %vm710, %v1287, 0.0
          %1290 = vadd.xlane.f32.xlu0 %v1289
          %v1291 = vpop.xlane.xlu0 %1290
          %v1292 = vadd.f32 %v1288, %v1291
          %v1293 = vmul.f32 %v1284, %v1191
          %v1295 = vsel %vm710, %v1287, 0
          %1297 = vmatprep.subr.mxu0 0.0
          %1298 = vmatpush1.msra.mxu0 %v1197
          %1299 = vmatprep.subr.mxu0 0.0
          %1300 = vmatpush1.msra.mxu0 0.0
          %1301 = vmatprep.subr.mxu0 0.0
          %1302 = vmatpush1.msra.mxu0 0.0
          %1303 = vmatprep.subr.mxu0 0.0
          %1304 = vmatpush1.msra.mxu0 0.0
          %1305 = vmatprep.subr.mxu0 0.0
          %1306 = vmatpush1.msra.mxu0 0.0
          %1307 = vmatprep.subr.mxu0 0.0
          %1308 = vmatpush1.msra.mxu0 0.0
          %1309 = vmatprep.subr.mxu0 0.0
          %1310 = vmatpush1.msra.mxu0 0.0
          %1311 = vmatprep.subr.mxu0 0.0
          %1312 = vmatpush1.msra.mxu0 0.0
          %1313 = vmatprep.subr.mxu0 0.0
          %1314 = vmatpush1.msra.mxu0 0.0
          %1315 = vmatprep.subr.mxu0 0.0
          %1316 = vmatpush1.msra.mxu0 0.0
          %1317 = vmatprep.subr.mxu0 0.0
          %1318 = vmatpush1.msra.mxu0 0.0
          %1319 = vmatprep.subr.mxu0 0.0
          %1320 = vmatpush1.msra.mxu0 0.0
          %1321 = vmatprep.subr.mxu0 0.0
          %1322 = vmatpush1.msra.mxu0 0.0
          %1323 = vmatprep.subr.mxu0 0.0
          %1324 = vmatpush1.msra.mxu0 0.0
          %1325 = vmatprep.subr.mxu0 0.0
          %1326 = vmatpush1.msra.mxu0 0.0
          %1327 = vmatprep.subr.mxu0 0.0
          %1328 = vmatpush1.msra.mxu0 0.0
          %1329 = vmatprep.subr.mxu0 0.0
          %1330 = vmatpush1.msra.mxu0 0.0
          %1331 = vmatprep.subr.mxu0 0.0
          %1332 = vmatpush1.msra.mxu0 0.0
          %1333 = vmatprep.subr.mxu0 0.0
          %1334 = vmatpush1.msra.mxu0 0.0
          %1335 = vmatprep.subr.mxu0 0.0
          %1336 = vmatpush1.msra.mxu0 0.0
          %1337 = vmatprep.subr.mxu0 0.0
          %1338 = vmatpush1.msra.mxu0 0.0
          %1339 = vmatprep.subr.mxu0 0.0
          %1340 = vmatpush1.msra.mxu0 0.0
          %1341 = vmatprep.subr.mxu0 0.0
          %1342 = vmatpush1.msra.mxu0 0.0
          %1343 = vmatprep.subr.mxu0 0.0
          %1344 = vmatpush1.msra.mxu0 0.0
          %1345 = vmatprep.subr.mxu0 0.0
          %1346 = vmatpush1.msra.mxu0 0.0
          %1347 = vmatprep.subr.mxu0 0.0
          %1348 = vmatpush1.msra.mxu0 0.0
          %1349 = vmatprep.subr.mxu0 0.0
          %1350 = vmatpush1.msra.mxu0 0.0
          %1351 = vmatprep.subr.mxu0 0.0
          %1352 = vmatpush1.msra.mxu0 0.0
          %1353 = vmatprep.subr.mxu0 0.0
          %1354 = vmatpush1.msra.mxu0 0.0
          %1355 = vmatprep.subr.mxu0 0.0
          %1356 = vmatpush1.msra.mxu0 0.0
          %1357 = vmatprep.subr.mxu0 0.0
          %1358 = vmatpush1.msra.mxu0 0.0
          %1359 = vmatprep.subr.mxu0 0.0
          %1360 = vmatpush1.msra.mxu0 0.0
          %1361 = vmatprep.mubr.f32.mxu0 0.0
          %1362 = vmatmul.mubr.f32.gmra.mrb[0].mxu0 %v1295
          %v1363 = vpop.f32.mrb[0].mxu0
          %v1364 = vadd.f32 0.0, %v1363
          %v1365 = vpop.f32.mrb[0].mxu0
          %1366 = vdwg.mxu0
          %v1367 = vadd.f32 %v1293, %v1364
        $region95: #{tpu_custom_call.1} parent=55 // loop_footer
          %s1186 = sadd.s32 %s1184, 1
        $region96: #{tpu_custom_call.1} parent=55 // loop_footer_branch
          %1183 = sbr.rel target = $region92
        $region97: #{tpu_custom_call.1} parent=55 // loop_exit
          _
        %v1368 = vrcp.pop %v1190
        %v1369 = vmul.f32 1.0, %v1368
        %v1370 = vmul.f32 %v1191, %v1369
        %1372 = vrot.lane.b32.xlu0 %v1370, 16
        %v1373 = vpop.permute.xlu0 %1372
        %vm1375 = vcmask 195712
        %1376 = vst.msk [vmem:[#allocation4] sm:$0xff] %vm1375, %v1373
        %1377 = vrot.lane.b32.xlu0 %v587, 104
        %v1378 = vpop.permute.xlu0 %1377
        %1380 = vxpose.xlu0.b32.start [1/16] %v1378, 128
        %1381 = vxpose.xlu0.b32.cont [2/16] 0.0, 128
        %1382 = vxpose.xlu0.b32.cont [3/16] 0.0, 128
        %1383 = vxpose.xlu0.b32.cont [4/16] 0.0, 128
        %1384 = vxpose.xlu0.b32.cont [5/16] 0.0, 128
        %1385 = vxpose.xlu0.b32.cont [6/16] 0.0, 128
        %1386 = vxpose.xlu0.b32.cont [7/16] 0.0, 128
        %1387 = vxpose.xlu0.b32.cont [8/16] 0.0, 128
        %1388 = vxpose.xlu0.b32.cont [9/16] 0.0, 128
        %1389 = vxpose.xlu0.b32.cont [10/16] 0.0, 128
        %1390 = vxpose.xlu0.b32.cont [11/16] 0.0, 128
        %1391 = vxpose.xlu0.b32.cont [12/16] 0.0, 128
        %1392 = vxpose.xlu0.b32.cont [13/16] 0.0, 128
        %1393 = vxpose.xlu0.b32.cont [14/16] 0.0, 128
        %1394 = vxpose.xlu0.b32.cont [15/16] 0.0, 128
        %1395 = vxpose.xlu0.b32.end [16/16] 0.0, 128
        %v1396 = vpop.trf.xlu0
        %v1397 = vpop.trf.xlu0
        %v1398 = vpop.trf.xlu0
        %v1399 = vpop.trf.xlu0
        %v1400 = vpop.trf.xlu0
        %v1401 = vpop.trf.xlu0
        %v1402 = vpop.trf.xlu0
        %v1403 = vpop.trf.xlu0
        %v1404 = vpop.trf.xlu0
        %v1405 = vpop.trf.xlu0
        %v1406 = vpop.trf.xlu0
        %v1407 = vpop.trf.xlu0
        %v1408 = vpop.trf.xlu0
        %v1409 = vpop.trf.xlu0
        %v1410 = vpop.trf.xlu0
        %v1411 = vpop.trf.xlu0
        %s1412 = sadd.s32 %s708, 24
        %s1413 = scalar_lea.vmem [#allocation2], %s1412
        %1414 = vst.msk [vmem:[%s1413] sm:$0xff] %vm710, %v1396
        %1415 = vrot.lane.b32.xlu0 %v668, 104
        %v1416 = vpop.permute.xlu0 %1415
        %s1418 = scalar_lea.vmem [#allocation3], %s1412
        %1419 = vst.msk [vmem:[%s1418] sm:$0xff] %vm710, %v1416
        // While loop
        $region98: #{tpu_custom_call.1} parent=55 // loop_pre_header
          _
        $region99: #{tpu_custom_call.1} parent=55 // loop_header
          %s1421 = sphi 0, %s1423
          %p1422 = scmp.ge.s32.totalorder %s1421, %s714
          %v1426 = vphi -inf, %v1518
          %v1427 = vphi 0.0, %v1529
          %v1428 = vphi 0.0, %v1604
        $region100: #{tpu_custom_call.1} parent=55 // loop_header_branch
          %1425 = sbr.rel (%p1422) target = $region104
        $region101: #{tpu_custom_call.1} parent=55 // loop_body
          %s1429 = smul.u32 %s1421, 8
          %s1430 = sadd.s32 %s1429, 24
          %s1431 = scalar_lea.vmem [#allocation2], %s1430
          %v1432 = vld [vmem:[%s1431] sm:$0xff]
          %s1433 = scalar_lea.vmem [#allocation3], %s1430
          %v1434 = vld [vmem:[%s1433] sm:$0xff]
          %1436 = vrot.lane.b32.xlu0 %v506, 104
          %v1437 = vpop.permute.xlu0 %1436
          %v1438 = vsel %vm710, %v1437, 0
          %1440 = vmatprep.subr.mxu0 0.0
          %1441 = vmatpush1.msra.mxu0 %v1432
          %1442 = vmatprep.subr.mxu0 0.0
          %1443 = vmatpush1.msra.mxu0 0.0
          %1444 = vmatprep.subr.mxu0 0.0
          %1445 = vmatpush1.msra.mxu0 0.0
          %1446 = vmatprep.subr.mxu0 0.0
          %1447 = vmatpush1.msra.mxu0 0.0
          %1448 = vmatprep.subr.mxu0 0.0
          %1449 = vmatpush1.msra.mxu0 0.0
          %1450 = vmatprep.subr.mxu0 0.0
          %1451 = vmatpush1.msra.mxu0 0.0
          %1452 = vmatprep.subr.mxu0 0.0
          %1453 = vmatpush1.msra.mxu0 0.0
          %1454 = vmatprep.subr.mxu0 0.0
          %1455 = vmatpush1.msra.mxu0 0.0
          %1456 = vmatprep.subr.mxu0 0.0
          %1457 = vmatpush1.msra.mxu0 0.0
          %1458 = vmatprep.subr.mxu0 0.0
          %1459 = vmatpush1.msra.mxu0 0.0
          %1460 = vmatprep.subr.mxu0 0.0
          %1461 = vmatpush1.msra.mxu0 0.0
          %1462 = vmatprep.subr.mxu0 0.0
          %1463 = vmatpush1.msra.mxu0 0.0
          %1464 = vmatprep.subr.mxu0 0.0
          %1465 = vmatpush1.msra.mxu0 0.0
          %1466 = vmatprep.subr.mxu0 0.0
          %1467 = vmatpush1.msra.mxu0 0.0
          %1468 = vmatprep.subr.mxu0 0.0
          %1469 = vmatpush1.msra.mxu0 0.0
          %1470 = vmatprep.subr.mxu0 0.0
          %1471 = vmatpush1.msra.mxu0 0.0
          %1472 = vmatprep.subr.mxu0 0.0
          %1473 = vmatpush1.msra.mxu0 0.0
          %1474 = vmatprep.subr.mxu0 0.0
          %1475 = vmatpush1.msra.mxu0 0.0
          %1476 = vmatprep.subr.mxu0 0.0
          %1477 = vmatpush1.msra.mxu0 0.0
          %1478 = vmatprep.subr.mxu0 0.0
          %1479 = vmatpush1.msra.mxu0 0.0
          %1480 = vmatprep.subr.mxu0 0.0
          %1481 = vmatpush1.msra.mxu0 0.0
          %1482 = vmatprep.subr.mxu0 0.0
          %1483 = vmatpush1.msra.mxu0 0.0
          %1484 = vmatprep.subr.mxu0 0.0
          %1485 = vmatpush1.msra.mxu0 0.0
          %1486 = vmatprep.subr.mxu0 0.0
          %1487 = vmatpush1.msra.mxu0 0.0
          %1488 = vmatprep.subr.mxu0 0.0
          %1489 = vmatpush1.msra.mxu0 0.0
          %1490 = vmatprep.subr.mxu0 0.0
          %1491 = vmatpush1.msra.mxu0 0.0
          %1492 = vmatprep.subr.mxu0 0.0
          %1493 = vmatpush1.msra.mxu0 0.0
          %1494 = vmatprep.subr.mxu0 0.0
          %1495 = vmatpush1.msra.mxu0 0.0
          %1496 = vmatprep.subr.mxu0 0.0
          %1497 = vmatpush1.msra.mxu0 0.0
          %1498 = vmatprep.subr.mxu0 0.0
          %1499 = vmatpush1.msra.mxu0 0.0
          %1500 = vmatprep.subr.mxu0 0.0
          %1501 = vmatpush1.msra.mxu0 0.0
          %1502 = vmatprep.subr.mxu0 0.0
          %1503 = vmatpush1.msra.mxu0 0.0
          %1504 = vmatprep.mubr.f32.mxu0 0.0
          %1505 = vmatmul.mubr.f32.gmra.mrb[0].mxu0 %v1438
          %v1506 = vpop.f32.mrb[0].mxu0
          %v1507 = vadd.f32 0.0, %v1506
          %v1508 = vpop.f32.mrb[0].mxu0
          %1509 = vdwg.mxu0
          %s1510 = ssub.s32 %s33, %s1421
          %s1511 = smul.u32 %s1510, 8
          %v1512 = vstv %s1511
          %vm1513 = vcmp.gt.s32.totalorder %v675, %v1512
          %v1514 = vsel %vm1513, -100000.0, %v1507
          %v1515 = vsel %vm710, %v1514, -inf
          %1516 = vmax.xlane.f32.xlu0 %v1515
          %v1517 = vpop.xlane.xlu0 %1516
          %v1518 = vmax.f32 %v1426, %v1517
          %v1519 = vsub.f32 %v1426, %v1518
          %v1520 = vmul.f32 %v1519, 1.442695
          %v1521 = vpow.pop %v1520
          %v1522 = vsub.f32 %v1514, %v1518
          %v1523 = vmul.f32 %v1522, 1.442695
          %v1524 = vpow.pop %v1523
          %v1525 = vmul.f32 %v1521, %v1427
          %v1526 = vsel %vm710, %v1524, 0.0
          %1527 = vadd.xlane.f32.xlu0 %v1526
          %v1528 = vpop.xlane.xlu0 %1527
          %v1529 = vadd.f32 %v1525, %v1528
          %v1530 = vmul.f32 %v1521, %v1428
          %v1532 = vsel %vm710, %v1524, 0
          %1534 = vmatprep.subr.mxu0 0.0
          %1535 = vmatpush1.msra.mxu0 %v1434
          %1536 = vmatprep.subr.mxu0 0.0
          %1537 = vmatpush1.msra.mxu0 0.0
          %1538 = vmatprep.subr.mxu0 0.0
          %1539 = vmatpush1.msra.mxu0 0.0
          %1540 = vmatprep.subr.mxu0 0.0
          %1541 = vmatpush1.msra.mxu0 0.0
          %1542 = vmatprep.subr.mxu0 0.0
          %1543 = vmatpush1.msra.mxu0 0.0
          %1544 = vmatprep.subr.mxu0 0.0
          %1545 = vmatpush1.msra.mxu0 0.0
          %1546 = vmatprep.subr.mxu0 0.0
          %1547 = vmatpush1.msra.mxu0 0.0
          %1548 = vmatprep.subr.mxu0 0.0
          %1549 = vmatpush1.msra.mxu0 0.0
          %1550 = vmatprep.subr.mxu0 0.0
          %1551 = vmatpush1.msra.mxu0 0.0
          %1552 = vmatprep.subr.mxu0 0.0
          %1553 = vmatpush1.msra.mxu0 0.0
          %1554 = vmatprep.subr.mxu0 0.0
          %1555 = vmatpush1.msra.mxu0 0.0
          %1556 = vmatprep.subr.mxu0 0.0
          %1557 = vmatpush1.msra.mxu0 0.0
          %1558 = vmatprep.subr.mxu0 0.0
          %1559 = vmatpush1.msra.mxu0 0.0
          %1560 = vmatprep.subr.mxu0 0.0
          %1561 = vmatpush1.msra.mxu0 0.0
          %1562 = vmatprep.subr.mxu0 0.0
          %1563 = vmatpush1.msra.mxu0 0.0
          %1564 = vmatprep.subr.mxu0 0.0
          %1565 = vmatpush1.msra.mxu0 0.0
          %1566 = vmatprep.subr.mxu0 0.0
          %1567 = vmatpush1.msra.mxu0 0.0
          %1568 = vmatprep.subr.mxu0 0.0
          %1569 = vmatpush1.msra.mxu0 0.0
          %1570 = vmatprep.subr.mxu0 0.0
          %1571 = vmatpush1.msra.mxu0 0.0
          %1572 = vmatprep.subr.mxu0 0.0
          %1573 = vmatpush1.msra.mxu0 0.0
          %1574 = vmatprep.subr.mxu0 0.0
          %1575 = vmatpush1.msra.mxu0 0.0
          %1576 = vmatprep.subr.mxu0 0.0
          %1577 = vmatpush1.msra.mxu0 0.0
          %1578 = vmatprep.subr.mxu0 0.0
          %1579 = vmatpush1.msra.mxu0 0.0
          %1580 = vmatprep.subr.mxu0 0.0
          %1581 = vmatpush1.msra.mxu0 0.0
          %1582 = vmatprep.subr.mxu0 0.0
          %1583 = vmatpush1.msra.mxu0 0.0
          %1584 = vmatprep.subr.mxu0 0.0
          %1585 = vmatpush1.msra.mxu0 0.0
          %1586 = vmatprep.subr.mxu0 0.0
          %1587 = vmatpush1.msra.mxu0 0.0
          %1588 = vmatprep.subr.mxu0 0.0
          %1589 = vmatpush1.msra.mxu0 0.0
          %1590 = vmatprep.subr.mxu0 0.0
          %1591 = vmatpush1.msra.mxu0 0.0
          %1592 = vmatprep.subr.mxu0 0.0
          %1593 = vmatpush1.msra.mxu0 0.0
          %1594 = vmatprep.subr.mxu0 0.0
          %1595 = vmatpush1.msra.mxu0 0.0
          %1596 = vmatprep.subr.mxu0 0.0
          %1597 = vmatpush1.msra.mxu0 0.0
          %1598 = vmatprep.mubr.f32.mxu0 0.0
          %1599 = vmatmul.mubr.f32.gmra.mrb[0].mxu0 %v1532
          %v1600 = vpop.f32.mrb[0].mxu0
          %v1601 = vadd.f32 0.0, %v1600
          %v1602 = vpop.f32.mrb[0].mxu0
          %1603 = vdwg.mxu0
          %v1604 = vadd.f32 %v1530, %v1601
        $region102: #{tpu_custom_call.1} parent=55 // loop_footer
          %s1423 = sadd.s32 %s1421, 1
        $region103: #{tpu_custom_call.1} parent=55 // loop_footer_branch
          %1420 = sbr.rel target = $region99
        $region104: #{tpu_custom_call.1} parent=55 // loop_exit
          _
        %v1605 = vrcp.pop %v1427
        %v1606 = vmul.f32 1.0, %v1605
        %v1607 = vmul.f32 %v1428, %v1606
        %1609 = vrot.lane.b32.xlu0 %v1607, 24
        %v1610 = vpop.permute.xlu0 %1609
        %vm1612 = vcmask 261312
        %1613 = vst.msk [vmem:[#allocation4] sm:$0xff] %vm1612, %v1610
        %v1614 = vld [vmem:[#allocation4] sm:$0xff]
        %v1615 = vld [vmem:[#allocation13] sm:$0xff]
        %v1616 = vld [vmem:[#allocation13 + $0x8] sm:$0xff]
        %v1617 = vld [vmem:[#allocation13 + $0x10] sm:$0xff]
        %v1618 = vld [vmem:[#allocation13 + $0x18] sm:$0xff]
        %v1619 = vld [vmem:[%s8] sm:$0x1]
        %v1621 = vlaneseq
        %v1622 = vshrl.u32 %v1621, 7
        %v1623 = vsub.s32 0, %v1622
        %v1624 = vrot.slane %v1619, %v1623
        %v1627 = vsel %vm435, %v1614, 0
        %1629 = vmatprep.subr.mxu0 0.0
        %1630 = vmatpush1.msra.mxu0 %v1615
        %1631 = vmatprep.subr.mxu0 0.0
        %1632 = vmatpush1.msra.mxu0 %v1616
        %1633 = vmatprep.subr.mxu0 0.0
        %1634 = vmatpush1.msra.mxu0 %v1617
        %1635 = vmatprep.subr.mxu0 0.0
        %1636 = vmatpush1.msra.mxu0 %v1618
        %1637 = vmatprep.subr.mxu0 0.0
        %1638 = vmatpush1.msra.mxu0 0.0
        %1639 = vmatprep.subr.mxu0 0.0
        %1640 = vmatpush1.msra.mxu0 0.0
        %1641 = vmatprep.subr.mxu0 0.0
        %1642 = vmatpush1.msra.mxu0 0.0
        %1643 = vmatprep.subr.mxu0 0.0
        %1644 = vmatpush1.msra.mxu0 0.0
        %1645 = vmatprep.subr.mxu0 0.0
        %1646 = vmatpush1.msra.mxu0 0.0
        %1647 = vmatprep.subr.mxu0 0.0
        %1648 = vmatpush1.msra.mxu0 0.0
        %1649 = vmatprep.subr.mxu0 0.0
        %1650 = vmatpush1.msra.mxu0 0.0
        %1651 = vmatprep.subr.mxu0 0.0
        %1652 = vmatpush1.msra.mxu0 0.0
        %1653 = vmatprep.subr.mxu0 0.0
        %1654 = vmatpush1.msra.mxu0 0.0
        %1655 = vmatprep.subr.mxu0 0.0
        %1656 = vmatpush1.msra.mxu0 0.0
        %1657 = vmatprep.subr.mxu0 0.0
        %1658 = vmatpush1.msra.mxu0 0.0
        %1659 = vmatprep.subr.mxu0 0.0
        %1660 = vmatpush1.msra.mxu0 0.0
        %1661 = vmatprep.subr.mxu0 0.0
        %1662 = vmatpush1.msra.mxu0 0.0
        %1663 = vmatprep.subr.mxu0 0.0
        %1664 = vmatpush1.msra.mxu0 0.0
        %1665 = vmatprep.subr.mxu0 0.0
        %1666 = vmatpush1.msra.mxu0 0.0
        %1667 = vmatprep.subr.mxu0 0.0
        %1668 = vmatpush1.msra.mxu0 0.0
        %1669 = vmatprep.subr.mxu0 0.0
        %1670 = vmatpush1.msra.mxu0 0.0
        %1671 = vmatprep.subr.mxu0 0.0
        %1672 = vmatpush1.msra.mxu0 0.0
        %1673 = vmatprep.subr.mxu0 0.0
        %1674 = vmatpush1.msra.mxu0 0.0
        %1675 = vmatprep.subr.mxu0 0.0
        %1676 = vmatpush1.msra.mxu0 0.0
        %1677 = vmatprep.subr.mxu0 0.0
        %1678 = vmatpush1.msra.mxu0 0.0
        %1679 = vmatprep.subr.mxu0 0.0
        %1680 = vmatpush1.msra.mxu0 0.0
        %1681 = vmatprep.subr.mxu0 0.0
        %1682 = vmatpush1.msra.mxu0 0.0
        %1683 = vmatprep.subr.mxu0 0.0
        %1684 = vmatpush1.msra.mxu0 0.0
        %1685 = vmatprep.subr.mxu0 0.0
        %1686 = vmatpush1.msra.mxu0 0.0
        %1687 = vmatprep.subr.mxu0 0.0
        %1688 = vmatpush1.msra.mxu0 0.0
        %1689 = vmatprep.subr.mxu0 0.0
        %1690 = vmatpush1.msra.mxu0 0.0
        %1691 = vmatprep.subr.mxu0 0.0
        %1692 = vmatpush1.msra.mxu0 0.0
        %1693 = vmatprep.mubr.f32.mxu0 0.0
        %1694 = vmatmul.mubr.f32.gmra.mrb[0].mxu0 %v1627
        %v1695 = vpop.f32.mrb[0].mxu0
        %v1696 = vadd.f32 %v1624, %v1695
        %v1697 = vpop.f32.mrb[0].mxu0
        %1698 = vdwg.mxu0
        %1699 = vst.msk [vmem:[%s422] sm:$0xff] %vm435, %v1696
        %s1700 = sand.u32 %s246, 1
        %s1701 = scalar_lea.sflag [#allocation7], %s1700
        %s1702 = sand.u32 %s246, 1
        %s1703 = smul.addr %s1702, 8
        %s1704 = scalar_lea.vmem [#allocation14], %s1703
        // Predicated region
        $region105: #{tpu_custom_call.1} parent=55 // pred_check
          %p1705 = pneg %p256
        $region106: #{tpu_custom_call.1} parent=55 // pred_check_branch
          %1707 = sbr.rel (%p1705) target = $region108
        $region107: #{tpu_custom_call.1} parent=55 // pred_region
          %s1709 = ssub.s32 128, 128
          %1710 = vsyncadd %s1701, %s1709
          %s1711 = sadd.s32 %s33, %s32
          %s1712 = smul.addr %s1711, 128
          %s1713 = scalar_lea.hbm %s9, %s1712
          %s1715 = sshll.u32 %s1704, 4
          %s1716 = int_to_ptr.vmem [resolvable:$true] %s1715
          %1718 = dma.vmem_to_hbm [thread:$0]  %s1716, 128, %s1713, %s1701
        $region108: #{tpu_custom_call.1} parent=55 // pred_fallthru
          _
      $region56: #{tpu_custom_call.1} parent=5 // pred_fallthru
        _
      %p1719 = scmp.le.s32.totalorder 2, %s23
      // Predicated region
      $region109: #{tpu_custom_call.1} parent=5 // pred_check
        %p1720 = pneg %p1719
      $region110: #{tpu_custom_call.1} parent=5 // pred_check_branch
        %1722 = sbr.rel (%p1720) target = $region112
      $region111: #{tpu_custom_call.1} parent=5 // pred_region
        %s1723 = ssub.s32 %s23, 2
        // Predicated region
        $region113: #{tpu_custom_call.1} parent=111 // pred_check
          %p1724 = pneg %p262
        $region114: #{tpu_custom_call.1} parent=111 // pred_check_branch
          %1726 = sbr.rel (%p1724) target = $region116
        $region115: #{tpu_custom_call.1} parent=111 // pred_region
          %s1727 = sand.u32 %s247, 1
          %s1728 = scalar_lea.sflag [#allocation7], %s1727
          %s1729 = sand.u32 %s247, 1
          %s1730 = smul.addr %s1729, 8
          %s1731 = scalar_lea.vmem [#allocation14], %s1730
          %1732 = dma.done %s1728, 128
        $region116: #{tpu_custom_call.1} parent=111 // pred_fallthru
          _
      $region112: #{tpu_custom_call.1} parent=5 // pred_fallthru
        _
    $region6: #{tpu_custom_call.1} parent=1 // loop_footer
      %s27 = sadd.s32 1, %s23
    $region7: #{tpu_custom_call.1} parent=1 // loop_footer_branch
      %22 = sbr.rel target = $region3
    $region8: #{tpu_custom_call.1} parent=1 // loop_exit
      _
    %1733 = vsyncpa [#allocation6], 1
    %s1734 = scalar_lea.sflag [#allocation6], 1
    %1735 = vsyncpa %s1734, 1
    %1736 = vsyncpa [#allocation9], 1
    %1737 = vsyncpa [#allocation12], 1
    %1738 = vsyncpa [#allocation7], 1
    %s1739 = scalar_lea.sflag [#allocation7], 1
    %1740 = vsyncpa %s1739, 1

</llo_original>
